<compile_context>
chip_gen: v6e
topology: v6e:2x2x1
jax: 0.10.0
libtpu: 0.0.40
codegen_flags: <defaults>
</compile_context>

<pallas_src>
import functools
import math

import jax
import jax.numpy as jnp
from jax import lax
from jax.experimental import pallas as pl
from jax.experimental.pallas import tpu as pltpu


# ----------------------------------------------------------------------------
# Kernel: one (batch, q-tile, k-tile) grid step.
#   q_ref        : (1, Tq, E)
#   k_ref, v_ref : (1, Tk, E)
#   wq/wk/wv     : (E, E)  block-diag kron(I_heads, W.T), matmul_dtype
#   wo           : (E, E)  W_out.T, matmul_dtype
#   b            : (1, E)  f32
#   o_ref        : (1, Tq, E)
# Scratch (persists across the Sk grid axis):
#   qh_sc  : (heads, Tq, Dh)  projected Q split per head (matmul_dtype)
#   m_sc   : (heads, Tq, 1)   running row max   (f32)
#   l_sc   : (heads, Tq, 1)   running row sum   (f32)
#   acc_sc : (heads, Tq, Dh)  running P@V accum (f32)
# ----------------------------------------------------------------------------
def _flash_attention_kernel(q_ref, k_ref, v_ref,
                            wq_ref, wk_ref, wv_ref, wo_ref, b_ref,
                            o_ref,
                            qh_sc, m_sc, l_sc, acc_sc,
                            *, heads, head_dim, scale, causal,
                            q_tile, k_tile, matmul_dtype):
    f32 = jnp.float32
    qi = pl.program_id(1)
    ki = pl.program_id(2)
    nk = pl.num_programs(2)

    def mm(a, b):
        # Lane-dense MXU matmul, low-precision operands, f32 accumulation.
        return jnp.dot(a.astype(matmul_dtype), b, preferred_element_type=f32)

    # ---- ki == 0: project Q once per (n, qi); reset online-softmax state ----
    @pl.when(ki == 0)
    def _init():
        qp = mm(q_ref[0], wq_ref[...]).astype(matmul_dtype)       # (Tq, E)
        for h in range(heads):
            lo = h * head_dim
            qh_sc[h] = lax.slice(qp, (0, lo), (q_tile, lo + head_dim))
        m_sc[...] = jnp.full_like(m_sc, -jnp.inf)
        l_sc[...] = jnp.zeros_like(l_sc)
        acc_sc[...] = jnp.zeros_like(acc_sc)

    # ---- stream one K/V tile through the online softmax ----
    def process_tile():
        # Shared-weight per-head projections as ONE lane-dense matmul each;
        # cast to the MXU dtype once (halves live intermediate footprint).
        kp = mm(k_ref[0], wk_ref[...]).astype(matmul_dtype)       # (Tk, E)
        vp = mm(v_ref[0], wv_ref[...]).astype(matmul_dtype)       # (Tk, E)

        if causal:
            # Hoisted out of the head loop: identical for every head.
            row = qi * q_tile + lax.broadcasted_iota(
                jnp.int32, (q_tile, k_tile), 0)
            col = ki * k_tile + lax.broadcasted_iota(
                jnp.int32, (q_tile, k_tile), 1)
            keep = col <= row

        for h in range(heads):
            lo = h * head_dim
            kh = lax.slice(kp, (0, lo), (k_tile, lo + head_dim))  # (Tk, Dh)
            vh = lax.slice(vp, (0, lo), (k_tile, lo + head_dim))  # (Tk, Dh)
            qh = qh_sc[h]                                          # (Tq, Dh)

            # energy = qh @ kh.T without materializing a transpose.
            energy = lax.dot_general(
                qh, kh, dimension_numbers=(((1,), (1,)), ((), ())),
                preferred_element_type=f32)                        # (Tq, Tk)
            if causal:
                energy = jnp.where(keep, energy, f32(-1e20))
            scaled = energy * f32(scale)   # reference scales by 1/sqrt(E)

            m_prev = m_sc[h]                                       # (Tq, 1)
            m_new = jnp.maximum(m_prev,
                                jnp.max(scaled, axis=-1, keepdims=True))
            alpha = jnp.exp(m_prev - m_new)
            p = jnp.exp(scaled - m_new)                            # (Tq, Tk)
            l_sc[h] = alpha * l_sc[h] + jnp.sum(p, axis=-1, keepdims=True)
            acc_sc[h] = alpha * acc_sc[h] + jnp.dot(
                p.astype(matmul_dtype), vh, preferred_element_type=f32)
            m_sc[h] = m_new

    if causal:
        # Skip K/V tiles lying entirely in the strict upper triangle.
        @pl.when(ki * k_tile <= qi * q_tile + (q_tile - 1))
        def _():
            process_tile()
    else:
        process_tile()

    # ---- ki == last: normalize, concat heads, ONE fused fc_out + bias ----
    @pl.when(ki == nk - 1)
    def _finalize():
        ctx = jnp.concatenate(
            [(acc_sc[h] / l_sc[h]).astype(matmul_dtype) for h in range(heads)],
            axis=-1)                                               # (Tq, E)
        out = jnp.dot(ctx, wo_ref[...], preferred_element_type=f32)
        o_ref[0] = (out + b_ref[...].astype(f32)).astype(o_ref.dtype)


# ----------------------------------------------------------------------------
# Wrapper
# ----------------------------------------------------------------------------
def _pick_tile(length, target):
    """Largest multiple-of-8 divisor of `length` that is <= target (or length)."""
    if length <= target:
        return length
    t = (target // 8) * 8
    while t >= 8:
        if length % t == 0:
            return t
        t -= 8
    return length


def self_attention_forward(values, keys, query, mask, params,
                           *, embed_size, heads,
                           q_tile=256, k_tile=256,
                           matmul_dtype=jnp.bfloat16, out_dtype=None):
    """values/keys/query: [N, len, embed_size]; mask: static python bool.

    Returns [N, query_len, embed_size] in `out_dtype` (default: query.dtype).
    """
    head_dim = embed_size // heads
    assert head_dim * heads == embed_size
    N, value_len, _ = values.shape
    key_len = keys.shape[1]
    query_len = query.shape[1]
    assert value_len == key_len, "values and keys must have the same length"
    if out_dtype is None:
        out_dtype = query.dtype

    tq = _pick_tile(query_len, q_tile)
    tk = _pick_tile(key_len, k_tile)
    grid = (N, query_len // tq, key_len // tk)

    # PyTorch nn.Linear weight is (out, in); pre-transpose ONCE on the host and
    # block-diagonalize the shared per-head projections so the kernel does
    # lane-dense (T, E) @ (E, E) matmuls with no in-kernel transposes.
    eye = jnp.eye(heads, dtype=jnp.float32)
    wv_bd = jnp.kron(eye, params["w_v"].T).astype(matmul_dtype)    # (E, E)
    wk_bd = jnp.kron(eye, params["w_k"].T).astype(matmul_dtype)    # (E, E)
    wq_bd = jnp.kron(eye, params["w_q"].T).astype(matmul_dtype)    # (E, E)
    w_out_t = params["w_out"].T.astype(matmul_dtype)               # (E, E)
    b_out = params["b_out"].astype(jnp.float32).reshape(1, embed_size)

    kernel = functools.partial(
        _flash_attention_kernel,
        heads=heads, head_dim=head_dim,
        scale=1.0 / math.sqrt(embed_size),     # matches the reference module
        causal=bool(mask),
        q_tile=tq, k_tile=tk,
        matmul_dtype=matmul_dtype)

    E = embed_size
    in_b = jnp.dtype(query.dtype).itemsize
    w_b = jnp.dtype(matmul_dtype).itemsize
    out_b = jnp.dtype(out_dtype).itemsize
    # Rough VMEM budget: double-buffered blocks + weights + scratch + working set.
    est = 2 * (tq * E + 2 * tk * E) * in_b
    est += 2 * tq * E * out_b
    est += 2 * (4 * E * E * w_b + 4 * E)
    est += heads * tq * (head_dim * (w_b + 4) + 8)
    est += 6 * tq * tk * 4
    vmem_limit = int(min(48 * 1024 * 1024, max(8 * 1024 * 1024, 2 * est)))

    out = pl.pallas_call(
        kernel,
        out_shape=jax.ShapeDtypeStruct((N, query_len, E), out_dtype),
        grid_spec=pltpu.PrefetchScalarGridSpec(
            num_scalar_prefetch=0,
            grid=grid,
            in_specs=[
                pl.BlockSpec((1, tq, E), lambda n, qi, ki: (n, qi, 0)),   # q
                pl.BlockSpec((1, tk, E), lambda n, qi, ki: (n, ki, 0)),   # k
                pl.BlockSpec((1, tk, E), lambda n, qi, ki: (n, ki, 0)),   # v
                pl.BlockSpec((E, E), lambda n, qi, ki: (0, 0)),           # wq
                pl.BlockSpec((E, E), lambda n, qi, ki: (0, 0)),           # wk
                pl.BlockSpec((E, E), lambda n, qi, ki: (0, 0)),           # wv
                pl.BlockSpec((E, E), lambda n, qi, ki: (0, 0)),           # wo
                pl.BlockSpec((1, E), lambda n, qi, ki: (0, 0)),           # bias
            ],
            out_specs=pl.BlockSpec((1, tq, E), lambda n, qi, ki: (n, qi, 0)),
            scratch_shapes=[
                pltpu.VMEM((heads, tq, head_dim), matmul_dtype),  # projected Q
                pltpu.VMEM((heads, tq, 1), jnp.float32),          # running max
                pltpu.VMEM((heads, tq, 1), jnp.float32),          # running sum
                pltpu.VMEM((heads, tq, head_dim), jnp.float32),   # running acc
            ],
        ),
        compiler_params=pltpu.CompilerParams(
            dimension_semantics=("parallel", "parallel", "arbitrary"),
            vmem_limit_bytes=vmem_limit),
    )(query, keys, values, wq_bd, wk_bd, wv_bd, w_out_t, b_out)

    return out


# ----------------------------------------------------------------------------
# Pure-JAX reference (mirrors the PyTorch module exactly, f32 throughout)
# ----------------------------------------------------------------------------
def _reference_forward(values, keys, query, mask, params,
                       *, embed_size, heads):
    head_dim = embed_size // heads
    N, value_len, _ = values.shape
    key_len = keys.shape[1]
    query_len = query.shape[1]

    v = values.reshape(N, value_len, heads, head_dim)
    k = keys.reshape(N, key_len, heads, head_dim)
    q = query.reshape(N, query_len, heads, head_dim)

    # nn.Linear: y = x @ W.T, W is (out, in)
    vp = jnp.einsum("nlhd,ed->nlhe", v, params["w_v"])
    kp = jnp.einsum("nlhd,ed->nlhe", k, params["w_k"])
    qp = jnp.einsum("nlhd,ed->nlhe", q, params["w_q"])

    energy = jnp.einsum("nqhd,nkhd->nhqk", qp, kp)
    if mask:
        row = lax.broadcasted_iota(jnp.int32, (query_len, key_len), 0)
        col = lax.broadcasted_iota(jnp.int32, (query_len, key_len), 1)
        energy = jnp.where((col <= row)[None, None], energy,
                           jnp.float32(-1e20))
    attn = jax.nn.softmax(energy / math.sqrt(embed_size), axis=-1)
    out = jnp.einsum("nhqk,nkhd->nqhd", attn, vp).reshape(
        N, query_len, embed_size)
    return out @ params["w_out"].T + params["b_out"]


# ----------------------------------------------------------------------------
# Deterministic parameter init (PyTorch-like uniform bounds, not a checkpoint)
# ----------------------------------------------------------------------------
def init_params(key, embed_size, heads):
    head_dim = embed_size // heads
    ks = jax.random.split(key, 5)
    bound_h = 1.0 / math.sqrt(head_dim)
    bound_e = 1.0 / math.sqrt(embed_size)
    return {
        "w_v": jax.random.uniform(ks[0], (head_dim, head_dim), jnp.float32,
                                  -bound_h, bound_h),
        "w_k": jax.random.uniform(ks[1], (head_dim, head_dim), jnp.float32,
                                  -bound_h, bound_h),
        "w_q": jax.random.uniform(ks[2], (head_dim, head_dim), jnp.float32,
                                  -bound_h, bound_h),
        "w_out": jax.random.uniform(ks[3], (embed_size, embed_size),
                                    jnp.float32, -bound_e, bound_e),
        "b_out": jax.random.uniform(ks[4], (1, embed_size), jnp.float32,
                                    -bound_e, bound_e),
    }


def _check(out, ref, name, max_tol=0.1, mean_tol=0.025):
    # Tolerances sized for bf16 MXU operands (f32 accumulation) vs an f32
    # reference; logic errors produce discrepancies ~10x larger than these.
    err = jnp.abs(out.astype(jnp.float32) - ref)
    max_err = float(jnp.max(err))
    mean_err = float(jnp.mean(err))
    assert max_err < max_tol, f"{name}: max abs error {max_err}"
    assert mean_err < mean_tol, f"{name}: mean abs error {mean_err}"


if __name__ == "__main__":
    root = jax.random.PRNGKey(0)
    key_small, key_big = jax.random.split(root)

    # --- Test 1: tiny shapes matching the tutorial module (single tile) ------
    embed_size, heads = 32, 2
    N, seq = 2, 8
    k_v, k_k, k_q, k_p = jax.random.split(key_small, 4)
    values = jax.random.normal(k_v, (N, seq, embed_size), jnp.float32)
    keys = jax.random.normal(k_k, (N, seq, embed_size), jnp.float32)
    query = jax.random.normal(k_q, (N, seq, embed_size), jnp.float32)
    params = init_params(k_p, embed_size, heads)

    for m in (False, True):
        out = self_attention_forward(values, keys, query, m, params,
                                     embed_size=embed_size, heads=heads)
        out = jax.block_until_ready(out)
        assert out.shape == (N, seq, embed_size)
        with jax.default_matmul_precision("highest"):
            ref = _reference_forward(values, keys, query, m, params,
                                     embed_size=embed_size, heads=heads)
        _check(out, ref, f"small mask={m}")

    # --- Test 2: larger shapes exercising the flash Sq/Sk tiling, the online
    #     softmax across K/V tiles and causal tile skipping (grid 2x2x4). -----
    embed_size2, heads2 = 64, 4
    N2, seq2 = 2, 256
    k_v2, k_k2, k_q2, k_p2 = jax.random.split(key_big, 4)
    values2 = jax.random.normal(k_v2, (N2, seq2, embed_size2), jnp.float32)
    keys2 = jax.random.normal(k_k2, (N2, seq2, embed_size2), jnp.float32)
    query2 = jax.random.normal(k_q2, (N2, seq2, embed_size2), jnp.float32)
    params2 = init_params(k_p2, embed_size2, heads2)

    out2 = self_attention_forward(values2, keys2, query2, True, params2,
                                  embed_size=embed_size2, heads=heads2,
                                  q_tile=128, k_tile=64)
    out2 = jax.block_until_ready(out2)
    assert out2.shape == (N2, seq2, embed_size2)
    with jax.default_matmul_precision("highest"):
        ref2 = _reference_forward(values2, keys2, query2, True, params2,
                                  embed_size=embed_size2, heads=heads2)
    _check(out2, ref2, "tiled causal")

    print("KERNEL_OK")
</pallas_src>

<mosaic_0001>
module attributes {stable_mosaic.version = 11 : i64} {
  func.func @_flash_attention_kernel(%arg0: i32, %arg1: i32, %arg2: i32, %arg3: memref<1x8x32xf32, #tpu.memory_space<vmem>>, %arg4: memref<1x8x32xf32, #tpu.memory_space<vmem>>, %arg5: memref<1x8x32xf32, #tpu.memory_space<vmem>>, %arg6: memref<32x32xbf16, #tpu.memory_space<vmem>>, %arg7: memref<32x32xbf16, #tpu.memory_space<vmem>>, %arg8: memref<32x32xbf16, #tpu.memory_space<vmem>>, %arg9: memref<32x32xbf16, #tpu.memory_space<vmem>>, %arg10: memref<1x32xf32, #tpu.memory_space<vmem>>, %arg11: memref<1x8x32xf32, #tpu.memory_space<vmem>>, %arg12: memref<2x8x16xbf16, #tpu.memory_space<vmem>>, %arg13: memref<2x8x1xf32, #tpu.memory_space<vmem>>, %arg14: memref<2x8x1xf32, #tpu.memory_space<vmem>>, %arg15: memref<2x8x16xf32, #tpu.memory_space<vmem>>) attributes {dimension_semantics = [#tpu.dimension_semantics<parallel>, #tpu.dimension_semantics<parallel>, #tpu.dimension_semantics<arbitrary>], iteration_bounds = array<i64: 2, 1, 1>, scalar_prefetch = 0 : i64, scratch_operands = 4 : i64, tpu.core_type = #tpu.core_type<tc>, window_params = [{transform_indices = @transform_0, window_bounds = array<i64: 1, 8, 32>}, {transform_indices = @transform_1, window_bounds = array<i64: 1, 8, 32>}, {transform_indices = @transform_2, window_bounds = array<i64: 1, 8, 32>}, {pipeline_mode = #tpu.pipeline_mode<synchronous>, transform_indices = @transform_3, window_bounds = array<i64: 32, 32>}, {pipeline_mode = #tpu.pipeline_mode<synchronous>, transform_indices = @transform_4, window_bounds = array<i64: 32, 32>}, {pipeline_mode = #tpu.pipeline_mode<synchronous>, transform_indices = @transform_5, window_bounds = array<i64: 32, 32>}, {pipeline_mode = #tpu.pipeline_mode<synchronous>, transform_indices = @transform_6, window_bounds = array<i64: 32, 32>}, {pipeline_mode = #tpu.pipeline_mode<synchronous>, transform_indices = @transform_7, window_bounds = array<i64: 1, 32>}, {transform_indices = @transform_8, window_bounds = array<i64: 1, 8, 32>}]} {
    %c0_i32 = arith.constant 0 : i32
    %0 = arith.cmpi eq, %arg2, %c0_i32 : i32
    %1 = arith.extui %0 : i1 to i32
    %c0_i32_0 = arith.constant 0 : i32
    %2 = arith.cmpi ne, %1, %c0_i32_0 : i32
    scf.if %2 {
      %c0_64 = arith.constant 0 : index
      %c0_65 = arith.constant 0 : index
      %c0_66 = arith.constant 0 : index
      %96 = vector.load %arg3[%c0_64, %c0_65, %c0_66] : memref<1x8x32xf32, #tpu.memory_space<vmem>>, vector<1x8x32xf32>
      %97 = vector.shape_cast %96 : vector<1x8x32xf32> to vector<8x32xf32>
      %c0_67 = arith.constant 0 : index
      %c0_68 = arith.constant 0 : index
      %98 = vector.load %arg6[%c0_67, %c0_68] : memref<32x32xbf16, #tpu.memory_space<vmem>>, vector<32x32xbf16>
      %99 = arith.truncf %97 : vector<8x32xf32> to vector<8x32xbf16>
      %cst_69 = arith.constant dense<0.000000e+00> : vector<8x32xf32>
      %100 = tpu.matmul %99, %98, %cst_69 {dimension_numbers = #tpu.dot_dimension_numbers<[1], [0], [0], [1], [0, 0, 1, 1], [], []>} : vector<8x32xbf16>, vector<32x32xbf16>, vector<8x32xf32> -> vector<8x32xf32>
      %101 = arith.truncf %100 : vector<8x32xf32> to vector<8x32xbf16>
      %102 = vector.extract_strided_slice %101 {offsets = [0, 0], sizes = [8, 16], strides = [1, 1]} : vector<8x32xbf16> to vector<8x16xbf16>
      %c0_70 = arith.constant 0 : index
      %c0_71 = arith.constant 0 : index
      %c0_72 = arith.constant 0 : index
      %103 = vector.load %arg12[%c0_70, %c0_71, %c0_72] : memref<2x8x16xbf16, #tpu.memory_space<vmem>>, vector<1x8x16xbf16>
      %104 = vector.shape_cast %103 : vector<1x8x16xbf16> to vector<8x16xbf16>
      %105 = vector.shape_cast %102 : vector<8x16xbf16> to vector<1x8x16xbf16>
      tpu.vector_store %arg12[%c0_70, %c0_71, %c0_72], %105 {strides = array<i32>} : memref<2x8x16xbf16, #tpu.memory_space<vmem>>, vector<1x8x16xbf16>,
      %106 = vector.extract_strided_slice %101 {offsets = [0, 16], sizes = [8, 16], strides = [1, 1]} : vector<8x32xbf16> to vector<8x16xbf16>
      %c1_73 = arith.constant 1 : index
      %c0_74 = arith.constant 0 : index
      %c0_75 = arith.constant 0 : index
      %107 = vector.load %arg12[%c1_73, %c0_74, %c0_75] : memref<2x8x16xbf16, #tpu.memory_space<vmem>>, vector<1x8x16xbf16>
      %108 = vector.shape_cast %107 : vector<1x8x16xbf16> to vector<8x16xbf16>
      %109 = vector.shape_cast %106 : vector<8x16xbf16> to vector<1x8x16xbf16>
      tpu.vector_store %arg12[%c1_73, %c0_74, %c0_75], %109 {strides = array<i32>} : memref<2x8x16xbf16, #tpu.memory_space<vmem>>, vector<1x8x16xbf16>,
      %cst_76 = arith.constant 0xFF800000 : f32
      %110 = vector.broadcast %cst_76 : f32 to vector<2x8x1xf32>
      %c0_77 = arith.constant 0 : index
      %c0_78 = arith.constant 0 : index
      %c0_79 = arith.constant 0 : index
      %111 = vector.load %arg13[%c0_77, %c0_78, %c0_79] : memref<2x8x1xf32, #tpu.memory_space<vmem>>, vector<2x8x1xf32>
      tpu.vector_store %arg13[%c0_77, %c0_78, %c0_79], %110 {strides = array<i32>} : memref<2x8x1xf32, #tpu.memory_space<vmem>>, vector<2x8x1xf32>,
      %cst_80 = arith.constant 0.000000e+00 : f32
      %112 = vector.broadcast %cst_80 : f32 to vector<2x8x1xf32>
      %c0_81 = arith.constant 0 : index
      %c0_82 = arith.constant 0 : index
      %c0_83 = arith.constant 0 : index
      %113 = vector.load %arg14[%c0_81, %c0_82, %c0_83] : memref<2x8x1xf32, #tpu.memory_space<vmem>>, vector<2x8x1xf32>
      tpu.vector_store %arg14[%c0_81, %c0_82, %c0_83], %112 {strides = array<i32>} : memref<2x8x1xf32, #tpu.memory_space<vmem>>, vector<2x8x1xf32>,
      %cst_84 = arith.constant 0.000000e+00 : f32
      %114 = vector.broadcast %cst_84 : f32 to vector<2x8x16xf32>
      %c0_85 = arith.constant 0 : index
      %c0_86 = arith.constant 0 : index
      %c0_87 = arith.constant 0 : index
      %115 = vector.load %arg15[%c0_85, %c0_86, %c0_87] : memref<2x8x16xf32, #tpu.memory_space<vmem>>, vector<2x8x16xf32>
      tpu.vector_store %arg15[%c0_85, %c0_86, %c0_87], %114 {strides = array<i32>} : memref<2x8x16xf32, #tpu.memory_space<vmem>>, vector<2x8x16xf32>,
    } else {
    }
    %c0 = arith.constant 0 : index
    %c0_1 = arith.constant 0 : index
    %c0_2 = arith.constant 0 : index
    %3 = vector.load %arg4[%c0, %c0_1, %c0_2] : memref<1x8x32xf32, #tpu.memory_space<vmem>>, vector<1x8x32xf32>
    %4 = vector.shape_cast %3 : vector<1x8x32xf32> to vector<8x32xf32>
    %c0_3 = arith.constant 0 : index
    %c0_4 = arith.constant 0 : index
    %5 = vector.load %arg7[%c0_3, %c0_4] : memref<32x32xbf16, #tpu.memory_space<vmem>>, vector<32x32xbf16>
    %6 = arith.truncf %4 : vector<8x32xf32> to vector<8x32xbf16>
    %cst = arith.constant dense<0.000000e+00> : vector<8x32xf32>
    %7 = tpu.matmul %6, %5, %cst {dimension_numbers = #tpu.dot_dimension_numbers<[1], [0], [0], [1], [0, 0, 1, 1], [], []>} : vector<8x32xbf16>, vector<32x32xbf16>, vector<8x32xf32> -> vector<8x32xf32>
    %8 = arith.truncf %7 : vector<8x32xf32> to vector<8x32xbf16>
    %c0_5 = arith.constant 0 : index
    %c0_6 = arith.constant 0 : index
    %c0_7 = arith.constant 0 : index
    %9 = vector.load %arg5[%c0_5, %c0_6, %c0_7] : memref<1x8x32xf32, #tpu.memory_space<vmem>>, vector<1x8x32xf32>
    %10 = vector.shape_cast %9 : vector<1x8x32xf32> to vector<8x32xf32>
    %c0_8 = arith.constant 0 : index
    %c0_9 = arith.constant 0 : index
    %11 = vector.load %arg8[%c0_8, %c0_9] : memref<32x32xbf16, #tpu.memory_space<vmem>>, vector<32x32xbf16>
    %12 = arith.truncf %10 : vector<8x32xf32> to vector<8x32xbf16>
    %cst_10 = arith.constant dense<0.000000e+00> : vector<8x32xf32>
    %13 = tpu.matmul %12, %11, %cst_10 {dimension_numbers = #tpu.dot_dimension_numbers<[1], [0], [0], [1], [0, 0, 1, 1], [], []>} : vector<8x32xbf16>, vector<32x32xbf16>, vector<8x32xf32> -> vector<8x32xf32>
    %14 = arith.truncf %13 : vector<8x32xf32> to vector<8x32xbf16>
    %15 = vector.extract_strided_slice %8 {offsets = [0, 0], sizes = [8, 16], strides = [1, 1]} : vector<8x32xbf16> to vector<8x16xbf16>
    %16 = vector.extract_strided_slice %14 {offsets = [0, 0], sizes = [8, 16], strides = [1, 1]} : vector<8x32xbf16> to vector<8x16xbf16>
    %c0_11 = arith.constant 0 : index
    %c0_12 = arith.constant 0 : index
    %c0_13 = arith.constant 0 : index
    %17 = vector.load %arg12[%c0_11, %c0_12, %c0_13] : memref<2x8x16xbf16, #tpu.memory_space<vmem>>, vector<1x8x16xbf16>
    %18 = vector.shape_cast %17 : vector<1x8x16xbf16> to vector<8x16xbf16>
    %cst_14 = arith.constant dense<0.000000e+00> : vector<8x8xf32>
    %19 = tpu.matmul %18, %15, %cst_14 {dimension_numbers = #tpu.dot_dimension_numbers<[1], [1], [0], [0], [0, 0, 1, 0], [], []>} : vector<8x16xbf16>, vector<8x16xbf16>, vector<8x8xf32> -> vector<8x8xf32>
    %cst_15 = arith.constant 0.176776692 : f32
    %20 = vector.broadcast %cst_15 : f32 to vector<8x8xf32>
    %21 = arith.mulf %19, %20 : vector<8x8xf32>
    %c0_16 = arith.constant 0 : index
    %c0_17 = arith.constant 0 : index
    %c0_18 = arith.constant 0 : index
    %22 = vector.load %arg13[%c0_16, %c0_17, %c0_18] : memref<2x8x1xf32, #tpu.memory_space<vmem>>, vector<1x8x1xf32>
    %23 = vector.shape_cast %22 : vector<1x8x1xf32> to vector<8x1xf32>
    %cst_19 = arith.constant dense<0xFF800000> : vector<8xf32>
    %24 = vector.multi_reduction <maximumf>, %21, %cst_19 [1] : vector<8x8xf32> to vector<8xf32>
    %25 = vector.shape_cast %24 : vector<8xf32> to vector<8x1xf32>
    %26 = arith.maximumf %23, %25 : vector<8x1xf32>
    %27 = arith.subf %23, %26 : vector<8x1xf32>
    %28 = math.exp %27 : vector<8x1xf32>
    %29 = vector.broadcast %26 : vector<8x1xf32> to vector<8x8xf32>
    %30 = arith.subf %21, %29 : vector<8x8xf32>
    %31 = math.exp %30 : vector<8x8xf32>
    %c0_20 = arith.constant 0 : index
    %c0_21 = arith.constant 0 : index
    %c0_22 = arith.constant 0 : index
    %32 = vector.load %arg14[%c0_20, %c0_21, %c0_22] : memref<2x8x1xf32, #tpu.memory_space<vmem>>, vector<1x8x1xf32>
    %33 = vector.shape_cast %32 : vector<1x8x1xf32> to vector<8x1xf32>
    %34 = arith.mulf %28, %33 : vector<8x1xf32>
    %cst_23 = arith.constant dense<0.000000e+00> : vector<8xf32>
    %35 = vector.multi_reduction <add>, %31, %cst_23 [1] : vector<8x8xf32> to vector<8xf32>
    %36 = vector.shape_cast %35 : vector<8xf32> to vector<8x1xf32>
    %37 = arith.addf %34, %36 : vector<8x1xf32>
    %c0_24 = arith.constant 0 : index
    %c0_25 = arith.constant 0 : index
    %c0_26 = arith.constant 0 : index
    %38 = vector.load %arg14[%c0_24, %c0_25, %c0_26] : memref<2x8x1xf32, #tpu.memory_space<vmem>>, vector<1x8x1xf32>
    %39 = vector.shape_cast %38 : vector<1x8x1xf32> to vector<8x1xf32>
    %40 = vector.shape_cast %37 : vector<8x1xf32> to vector<1x8x1xf32>
    tpu.vector_store %arg14[%c0_24, %c0_25, %c0_26], %40 {strides = array<i32>} : memref<2x8x1xf32, #tpu.memory_space<vmem>>, vector<1x8x1xf32>,
    %c0_27 = arith.constant 0 : index
    %c0_28 = arith.constant 0 : index
    %c0_29 = arith.constant 0 : index
    %41 = vector.load %arg15[%c0_27, %c0_28, %c0_29] : memref<2x8x16xf32, #tpu.memory_space<vmem>>, vector<1x8x16xf32>
    %42 = vector.shape_cast %41 : vector<1x8x16xf32> to vector<8x16xf32>
    %43 = vector.broadcast %28 : vector<8x1xf32> to vector<8x16xf32>
    %44 = arith.mulf %43, %42 : vector<8x16xf32>
    %45 = arith.truncf %31 : vector<8x8xf32> to vector<8x8xbf16>
    %cst_30 = arith.constant dense<0.000000e+00> : vector<8x16xf32>
    %46 = tpu.matmul %45, %16, %cst_30 {dimension_numbers = #tpu.dot_dimension_numbers<[1], [0], [0], [1], [0, 0, 1, 1], [], []>} : vector<8x8xbf16>, vector<8x16xbf16>, vector<8x16xf32> -> vector<8x16xf32>
    %47 = arith.addf %44, %46 : vector<8x16xf32>
    %c0_31 = arith.constant 0 : index
    %c0_32 = arith.constant 0 : index
    %c0_33 = arith.constant 0 : index
    %48 = vector.load %arg15[%c0_31, %c0_32, %c0_33] : memref<2x8x16xf32, #tpu.memory_space<vmem>>, vector<1x8x16xf32>
    %49 = vector.shape_cast %48 : vector<1x8x16xf32> to vector<8x16xf32>
    %50 = vector.shape_cast %47 : vector<8x16xf32> to vector<1x8x16xf32>
    tpu.vector_store %arg15[%c0_31, %c0_32, %c0_33], %50 {strides = array<i32>} : memref<2x8x16xf32, #tpu.memory_space<vmem>>, vector<1x8x16xf32>,
    %c0_34 = arith.constant 0 : index
    %c0_35 = arith.constant 0 : index
    %c0_36 = arith.constant 0 : index
    %51 = vector.load %arg13[%c0_34, %c0_35, %c0_36] : memref<2x8x1xf32, #tpu.memory_space<vmem>>, vector<1x8x1xf32>
    %52 = vector.shape_cast %51 : vector<1x8x1xf32> to vector<8x1xf32>
    %53 = vector.shape_cast %26 : vector<8x1xf32> to vector<1x8x1xf32>
    tpu.vector_store %arg13[%c0_34, %c0_35, %c0_36], %53 {strides = array<i32>} : memref<2x8x1xf32, #tpu.memory_space<vmem>>, vector<1x8x1xf32>,
    %54 = vector.extract_strided_slice %8 {offsets = [0, 16], sizes = [8, 16], strides = [1, 1]} : vector<8x32xbf16> to vector<8x16xbf16>
    %55 = vector.extract_strided_slice %14 {offsets = [0, 16], sizes = [8, 16], strides = [1, 1]} : vector<8x32xbf16> to vector<8x16xbf16>
    %c1 = arith.constant 1 : index
    %c0_37 = arith.constant 0 : index
    %c0_38 = arith.constant 0 : index
    %56 = vector.load %arg12[%c1, %c0_37, %c0_38] : memref<2x8x16xbf16, #tpu.memory_space<vmem>>, vector<1x8x16xbf16>
    %57 = vector.shape_cast %56 : vector<1x8x16xbf16> to vector<8x16xbf16>
    %cst_39 = arith.constant dense<0.000000e+00> : vector<8x8xf32>
    %58 = tpu.matmul %57, %54, %cst_39 {dimension_numbers = #tpu.dot_dimension_numbers<[1], [1], [0], [0], [0, 0, 1, 0], [], []>} : vector<8x16xbf16>, vector<8x16xbf16>, vector<8x8xf32> -> vector<8x8xf32>
    %cst_40 = arith.constant 0.176776692 : f32
    %59 = vector.broadcast %cst_40 : f32 to vector<8x8xf32>
    %60 = arith.mulf %58, %59 : vector<8x8xf32>
    %c1_41 = arith.constant 1 : index
    %c0_42 = arith.constant 0 : index
    %c0_43 = arith.constant 0 : index
    %61 = vector.load %arg13[%c1_41, %c0_42, %c0_43] : memref<2x8x1xf32, #tpu.memory_space<vmem>>, vector<1x8x1xf32>
    %62 = vector.shape_cast %61 : vector<1x8x1xf32> to vector<8x1xf32>
    %cst_44 = arith.constant dense<0xFF800000> : vector<8xf32>
    %63 = vector.multi_reduction <maximumf>, %60, %cst_44 [1] : vector<8x8xf32> to vector<8xf32>
    %64 = vector.shape_cast %63 : vector<8xf32> to vector<8x1xf32>
    %65 = arith.maximumf %62, %64 : vector<8x1xf32>
    %66 = arith.subf %62, %65 : vector<8x1xf32>
    %67 = math.exp %66 : vector<8x1xf32>
    %68 = vector.broadcast %65 : vector<8x1xf32> to vector<8x8xf32>
    %69 = arith.subf %60, %68 : vector<8x8xf32>
    %70 = math.exp %69 : vector<8x8xf32>
    %c1_45 = arith.constant 1 : index
    %c0_46 = arith.constant 0 : index
    %c0_47 = arith.constant 0 : index
    %71 = vector.load %arg14[%c1_45, %c0_46, %c0_47] : memref<2x8x1xf32, #tpu.memory_space<vmem>>, vector<1x8x1xf32>
    %72 = vector.shape_cast %71 : vector<1x8x1xf32> to vector<8x1xf32>
    %73 = arith.mulf %67, %72 : vector<8x1xf32>
    %cst_48 = arith.constant dense<0.000000e+00> : vector<8xf32>
    %74 = vector.multi_reduction <add>, %70, %cst_48 [1] : vector<8x8xf32> to vector<8xf32>
    %75 = vector.shape_cast %74 : vector<8xf32> to vector<8x1xf32>
    %76 = arith.addf %73, %75 : vector<8x1xf32>
    %c1_49 = arith.constant 1 : index
    %c0_50 = arith.constant 0 : index
    %c0_51 = arith.constant 0 : index
    %77 = vector.load %arg14[%c1_49, %c0_50, %c0_51] : memref<2x8x1xf32, #tpu.memory_space<vmem>>, vector<1x8x1xf32>
    %78 = vector.shape_cast %77 : vector<1x8x1xf32> to vector<8x1xf32>
    %79 = vector.shape_cast %76 : vector<8x1xf32> to vector<1x8x1xf32>
    tpu.vector_store %arg14[%c1_49, %c0_50, %c0_51], %79 {strides = array<i32>} : memref<2x8x1xf32, #tpu.memory_space<vmem>>, vector<1x8x1xf32>,
    %c1_52 = arith.constant 1 : index
    %c0_53 = arith.constant 0 : index
    %c0_54 = arith.constant 0 : index
    %80 = vector.load %arg15[%c1_52, %c0_53, %c0_54] : memref<2x8x16xf32, #tpu.memory_space<vmem>>, vector<1x8x16xf32>
    %81 = vector.shape_cast %80 : vector<1x8x16xf32> to vector<8x16xf32>
    %82 = vector.broadcast %67 : vector<8x1xf32> to vector<8x16xf32>
    %83 = arith.mulf %82, %81 : vector<8x16xf32>
    %84 = arith.truncf %70 : vector<8x8xf32> to vector<8x8xbf16>
    %cst_55 = arith.constant dense<0.000000e+00> : vector<8x16xf32>
    %85 = tpu.matmul %84, %55, %cst_55 {dimension_numbers = #tpu.dot_dimension_numbers<[1], [0], [0], [1], [0, 0, 1, 1], [], []>} : vector<8x8xbf16>, vector<8x16xbf16>, vector<8x16xf32> -> vector<8x16xf32>
    %86 = arith.addf %83, %85 : vector<8x16xf32>
    %c1_56 = arith.constant 1 : index
    %c0_57 = arith.constant 0 : index
    %c0_58 = arith.constant 0 : index
    %87 = vector.load %arg15[%c1_56, %c0_57, %c0_58] : memref<2x8x16xf32, #tpu.memory_space<vmem>>, vector<1x8x16xf32>
    %88 = vector.shape_cast %87 : vector<1x8x16xf32> to vector<8x16xf32>
    %89 = vector.shape_cast %86 : vector<8x16xf32> to vector<1x8x16xf32>
    tpu.vector_store %arg15[%c1_56, %c0_57, %c0_58], %89 {strides = array<i32>} : memref<2x8x16xf32, #tpu.memory_space<vmem>>, vector<1x8x16xf32>,
    %c1_59 = arith.constant 1 : index
    %c0_60 = arith.constant 0 : index
    %c0_61 = arith.constant 0 : index
    %90 = vector.load %arg13[%c1_59, %c0_60, %c0_61] : memref<2x8x1xf32, #tpu.memory_space<vmem>>, vector<1x8x1xf32>
    %91 = vector.shape_cast %90 : vector<1x8x1xf32> to vector<8x1xf32>
    %92 = vector.shape_cast %65 : vector<8x1xf32> to vector<1x8x1xf32>
    tpu.vector_store %arg13[%c1_59, %c0_60, %c0_61], %92 {strides = array<i32>} : memref<2x8x1xf32, #tpu.memory_space<vmem>>, vector<1x8x1xf32>,
    %c0_i32_62 = arith.constant 0 : i32
    %93 = arith.cmpi eq, %arg2, %c0_i32_62 : i32
    %94 = arith.extui %93 : i1 to i32
    %c0_i32_63 = arith.constant 0 : i32
    %95 = arith.cmpi ne, %94, %c0_i32_63 : i32
    scf.if %95 {
      %c0_64 = arith.constant 0 : index
      %c0_65 = arith.constant 0 : index
      %c0_66 = arith.constant 0 : index
      %96 = vector.load %arg15[%c0_64, %c0_65, %c0_66] : memref<2x8x16xf32, #tpu.memory_space<vmem>>, vector<1x8x16xf32>
      %97 = vector.shape_cast %96 : vector<1x8x16xf32> to vector<8x16xf32>
      %c0_67 = arith.constant 0 : index
      %c0_68 = arith.constant 0 : index
      %c0_69 = arith.constant 0 : index
      %98 = vector.load %arg14[%c0_67, %c0_68, %c0_69] : memref<2x8x1xf32, #tpu.memory_space<vmem>>, vector<1x8x1xf32>
      %99 = vector.shape_cast %98 : vector<1x8x1xf32> to vector<8x1xf32>
      %100 = vector.broadcast %99 : vector<8x1xf32> to vector<8x16xf32>
      %101 = arith.divf %97, %100 : vector<8x16xf32>
      %102 = arith.truncf %101 : vector<8x16xf32> to vector<8x16xbf16>
      %c1_70 = arith.constant 1 : index
      %c0_71 = arith.constant 0 : index
      %c0_72 = arith.constant 0 : index
      %103 = vector.load %arg15[%c1_70, %c0_71, %c0_72] : memref<2x8x16xf32, #tpu.memory_space<vmem>>, vector<1x8x16xf32>
      %104 = vector.shape_cast %103 : vector<1x8x16xf32> to vector<8x16xf32>
      %c1_73 = arith.constant 1 : index
      %c0_74 = arith.constant 0 : index
      %c0_75 = arith.constant 0 : index
      %105 = vector.load %arg14[%c1_73, %c0_74, %c0_75] : memref<2x8x1xf32, #tpu.memory_space<vmem>>, vector<1x8x1xf32>
      %106 = vector.shape_cast %105 : vector<1x8x1xf32> to vector<8x1xf32>
      %107 = vector.broadcast %106 : vector<8x1xf32> to vector<8x16xf32>
      %108 = arith.divf %104, %107 : vector<8x16xf32>
      %109 = arith.truncf %108 : vector<8x16xf32> to vector<8x16xbf16>
      %110 = tpu.concatenate %102, %109 in 1 : vector<8x16xbf16>, vector<8x16xbf16> -> vector<8x32xbf16>
      %c0_76 = arith.constant 0 : index
      %c0_77 = arith.constant 0 : index
      %111 = vector.load %arg9[%c0_76, %c0_77] : memref<32x32xbf16, #tpu.memory_space<vmem>>, vector<32x32xbf16>
      %cst_78 = arith.constant dense<0.000000e+00> : vector<8x32xf32>
      %112 = tpu.matmul %110, %111, %cst_78 {dimension_numbers = #tpu.dot_dimension_numbers<[1], [0], [0], [1], [0, 0, 1, 1], [], []>} : vector<8x32xbf16>, vector<32x32xbf16>, vector<8x32xf32> -> vector<8x32xf32>
      %c0_79 = arith.constant 0 : index
      %c0_80 = arith.constant 0 : index
      %113 = vector.load %arg10[%c0_79, %c0_80] : memref<1x32xf32, #tpu.memory_space<vmem>>, vector<1x32xf32>
      %114 = vector.broadcast %113 : vector<1x32xf32> to vector<8x32xf32>
      %115 = arith.addf %112, %114 : vector<8x32xf32>
      %c0_81 = arith.constant 0 : index
      %c0_82 = arith.constant 0 : index
      %c0_83 = arith.constant 0 : index
      %116 = vector.load %arg11[%c0_81, %c0_82, %c0_83] : memref<1x8x32xf32, #tpu.memory_space<vmem>>, vector<1x8x32xf32>
      %117 = vector.shape_cast %116 : vector<1x8x32xf32> to vector<8x32xf32>
      %118 = vector.shape_cast %115 : vector<8x32xf32> to vector<1x8x32xf32>
      tpu.vector_store %arg11[%c0_81, %c0_82, %c0_83], %118 {strides = array<i32>} : memref<1x8x32xf32, #tpu.memory_space<vmem>>, vector<1x8x32xf32>,
    } else {
    }
    return
  }
  func.func @transform_0(%arg0: i32, %arg1: i32, %arg2: i32) -> (i32, i32, i32) {
    %c0_i32 = arith.constant 0 : i32
    %c0_i32_0 = arith.constant 0 : i32
    return %arg0, %arg1, %c0_i32 : i32, i32, i32
  }
  func.func @transform_1(%arg0: i32, %arg1: i32, %arg2: i32) -> (i32, i32, i32) {
    %c0_i32 = arith.constant 0 : i32
    %c0_i32_0 = arith.constant 0 : i32
    return %arg0, %arg2, %c0_i32 : i32, i32, i32
  }
  func.func @transform_2(%arg0: i32, %arg1: i32, %arg2: i32) -> (i32, i32, i32) {
    %c0_i32 = arith.constant 0 : i32
    %c0_i32_0 = arith.constant 0 : i32
    return %arg0, %arg2, %c0_i32 : i32, i32, i32
  }
  func.func @transform_3(%arg0: i32, %arg1: i32, %arg2: i32) -> (i32, i32) {
    %c0_i32 = arith.constant 0 : i32
    %c0_i32_0 = arith.constant 0 : i32
    %c0_i32_1 = arith.constant 0 : i32
    return %c0_i32, %c0_i32_0 : i32, i32
  }
  func.func @transform_4(%arg0: i32, %arg1: i32, %arg2: i32) -> (i32, i32) {
    %c0_i32 = arith.constant 0 : i32
    %c0_i32_0 = arith.constant 0 : i32
    %c0_i32_1 = arith.constant 0 : i32
    return %c0_i32, %c0_i32_0 : i32, i32
  }
  func.func @transform_5(%arg0: i32, %arg1: i32, %arg2: i32) -> (i32, i32) {
    %c0_i32 = arith.constant 0 : i32
    %c0_i32_0 = arith.constant 0 : i32
    %c0_i32_1 = arith.constant 0 : i32
    return %c0_i32, %c0_i32_0 : i32, i32
  }
  func.func @transform_6(%arg0: i32, %arg1: i32, %arg2: i32) -> (i32, i32) {
    %c0_i32 = arith.constant 0 : i32
    %c0_i32_0 = arith.constant 0 : i32
    %c0_i32_1 = arith.constant 0 : i32
    return %c0_i32, %c0_i32_0 : i32, i32
  }
  func.func @transform_7(%arg0: i32, %arg1: i32, %arg2: i32) -> (i32, i32) {
    %c0_i32 = arith.constant 0 : i32
    %c0_i32_0 = arith.constant 0 : i32
    %c0_i32_1 = arith.constant 0 : i32
    return %c0_i32, %c0_i32_0 : i32, i32
  }
  func.func @transform_8(%arg0: i32, %arg1: i32, %arg2: i32) -> (i32, i32, i32) {
    %c0_i32 = arith.constant 0 : i32
    %c0_i32_0 = arith.constant 0 : i32
    return %arg0, %arg1, %c0_i32 : i32, i32, i32
  }
}

</mosaic_0001>

<llo_original>
// kernel: tpu_custom_call.1
$region0: #{tpu_custom_call.1}
  #allocation0 [shape = 'u32[]', space=smem, size = 0x4, offset = 0x4, fixed_abs, tag = 'smem constant byte address 0x4 - core index']
  #allocation1 [shape = 'u32[144,128]{1,0:T(1,128)}', space=vmem, size = 0x12000, scoped, tag = 'internal scratch']
  #allocation2 [shape = 'bf16[2,8,16]{2,1,0:T(8,128)(2,1)}', space=vmem, size = 0x1000, scoped, tag = 'scratch operand']
  #allocation3 [shape = 'f32[2,8,1]{2,1,0:T(8,128)}', space=vmem, size = 0x2000, scoped, tag = 'scratch operand']
  #allocation4 [shape = 'f32[2,8,1]{2,1,0:T(8,128)}', space=vmem, size = 0x2000, scoped, tag = 'scratch operand']
  #allocation5 [shape = 'f32[2,8,16]{2,1,0:T(8,128)}', space=vmem, size = 0x2000, scoped, tag = 'scratch operand']
  %s0 = inlined_call_operand.hbm [shape: f32[2,8,32], index: 0, kind: input, shape index: {}]
  %s1 = inlined_call_operand.hbm [shape: f32[2,8,32], index: 1, kind: input, shape index: {}]
  %s2 = inlined_call_operand.hbm [shape: f32[2,8,32], index: 2, kind: input, shape index: {}]
  %s3 = inlined_call_operand.hbm [shape: bf16[32,32], index: 3, kind: input, shape index: {}]
  %s4 = inlined_call_operand.hbm [shape: bf16[32,32], index: 4, kind: input, shape index: {}]
  %s5 = inlined_call_operand.hbm [shape: bf16[32,32], index: 5, kind: input, shape index: {}]
  %s6 = inlined_call_operand.hbm [shape: bf16[32,32], index: 6, kind: input, shape index: {}]
  %s7 = inlined_call_operand.vmem [shape: f32[1,32], index: 7, kind: input, shape index: {}]
  %s8 = inlined_call_operand.hbm [shape: f32[2,8,32], index: 8, kind: output, shape index: {}]
  %s9 = sld [smem:[#allocation0]]
  $region101: #{tpu_custom_call.1} parent=0
    _
  %s11 = ssub.s32 1, %s9
  %s12 = scalar_select 0, %s11, %s9
  $region1: #{tpu_custom_call.1} parent=0
    #allocation6 [shape = 'u8[8192]{0}', space=vmem, size = 0x2000, scoped, tag = 'input window, operand 0']
    #allocation7 [shape = 's32[2]{0}', space=sflag, size = 0x8, scoped, tag = 'scoped memory for tpu_custom_call.1']
    #allocation8 [shape = 's32[2]{0}', space=sflag, size = 0x8, scoped, tag = 'scoped memory for tpu_custom_call.1']
    #allocation9 [shape = 'u8[8192]{0}', space=vmem, size = 0x2000, scoped, tag = 'input window, operand 1']
    #allocation10 [shape = 's32[2]{0}', space=sflag, size = 0x8, scoped, tag = 'scoped memory for tpu_custom_call.1']
    #allocation11 [shape = 'u8[8192]{0}', space=vmem, size = 0x2000, scoped, tag = 'input window, operand 2']
    #allocation12 [shape = 'u8[8192]{0}', space=vmem, size = 0x2000, scoped, tag = 'input window, operand 3, single buffered']
    #allocation13 [shape = 's32[1]{0}', space=sflag, size = 0x4, scoped, tag = 'scoped memory for tpu_custom_call.1']
    #allocation14 [shape = 'u8[8192]{0}', space=vmem, size = 0x2000, scoped, tag = 'input window, operand 4, single buffered']
    #allocation15 [shape = 'u8[8192]{0}', space=vmem, size = 0x2000, scoped, tag = 'input window, operand 5, single buffered']
    #allocation16 [shape = 's32[1]{0}', space=sflag, size = 0x4, scoped, tag = 'scoped memory for tpu_custom_call.1']
    #allocation17 [shape = 'u8[8192]{0}', space=vmem, size = 0x2000, scoped, tag = 'input window, operand 6, single buffered']
    #allocation18 [shape = 'u8[8192]{0}', space=vmem, size = 0x2000, scoped, tag = 'output window, operand 0']
    %13 = vsyncpa [#allocation7], 0
    %s14 = scalar_lea.sflag [#allocation7], 1
    %15 = vsyncpa %s14, 0
    %16 = vsyncpa [#allocation10], 0
    %s17 = scalar_lea.sflag [#allocation10], 1
    %18 = vsyncpa %s17, 0
    %19 = vsyncpa [#allocation13], 0
    %20 = vsyncpa [#allocation16], 0
    %21 = vsyncpa [#allocation8], 0
    %s22 = scalar_lea.sflag [#allocation8], 1
    %23 = vsyncpa %s22, 0
    loop: start=0, step=1, limit=4
    $region2: #{tpu_custom_call.1} parent=1 // loop_pre_header
      _
    $region3: #{tpu_custom_call.1} parent=1 // loop_header
      %s25 = sphi 0, %s29
      %p26 = scmp.ge.s32.totalorder %s25, 4
      %s32 = sphi 0, %s51
      %s33 = sphi 0, %s47
      %s34 = sphi 0, %s43
      %s35 = sphi 0, %s32
      %s36 = sphi 0, %s33
      %s37 = sphi 0, %s34
      %s38 = sphi 0, %s35
      %s39 = sphi 0, %s36
      %s40 = sphi 0, %s37
      %s56 = sphi 0, %s58
      %s59 = sphi 0, %s56
      %s60 = sphi 0, %s59
      %s76 = sphi 0, %s60
      %s84 = sphi 0, %s86
      %s87 = sphi 0, %s84
      %s88 = sphi 0, %s87
      %s104 = sphi 0, %s88
      %s112 = sphi 0, %s114
      %s115 = sphi 0, %s112
      %s116 = sphi 0, %s115
      %s132 = sphi 0, %s116
      %s136 = sphi 0, %s136
      %s138 = sphi 0, %s136
      %s139 = sphi 0, %s138
      %s153 = sphi 0, %s139
      %s157 = sphi 0, %s157
      %s159 = sphi 0, %s157
      %s160 = sphi 0, %s159
      %s174 = sphi 0, %s160
      %s178 = sphi 0, %s178
      %s180 = sphi 0, %s178
      %s181 = sphi 0, %s180
      %s195 = sphi 0, %s181
      %s199 = sphi 0, %s199
      %s201 = sphi 0, %s199
      %s202 = sphi 0, %s201
      %s216 = sphi 0, %s202
      %s220 = sphi 0, %s220
      %s222 = sphi 0, %s220
      %s223 = sphi 0, %s222
      %s237 = sphi 0, %s223
      %s245 = sphi 0, %s247
      %s248 = sphi 0, %s245
      %s249 = sphi 0, %s248
      %s265 = sphi 0, %s249
    $region4: #{tpu_custom_call.1} parent=1 // loop_header_branch
      %28 = sbr.rel (%p26) target = $region8
    $region5: #{tpu_custom_call.1} parent=1 // loop_body
      %s30 = ssub.s32 %s25, 1
      %s31 = ssub.s32 %s25, 2
      %s41 = sadd.s32 1, %s34
      %p42 = scmp.ge.s32.totalorder %s41, 1
      %s43 = scalar_select %p42, 0, %s41
      %s44 = sadd.s32 1, %s33
      %s45 = scalar_select %p42, %s44, %s33
      %p46 = scmp.ge.s32.totalorder %s45, 1
      %s47 = scalar_select %p46, 0, %s45
      %s48 = sadd.s32 1, %s32
      %s49 = scalar_select %p46, %s48, %s32
      %p50 = scmp.ge.s32.totalorder %s49, 2
      %s51 = scalar_select %p50, 0, %s49
      %s52 = ssub.s32 %s32, %s51
      %s53 = ssub.s32 %s33, %s47
      %s54 = sor.u32 %s52, %s53
      %p55 = scmp.eq.s32.totalorder %s54, 0
      %s57 = sadd.s32 %s56, 1
      %s58 = scalar_select %p55, %s56, %s57
      %p61 = pneg %p55
      %p62 = scmp.eq.s32.totalorder %s25, 1
      %p63 = por %p61, %p62
      %p64 = scmp.ne.s32.totalorder %s56, %s59
      %p65 = scmp.eq.s32.totalorder %s25, 0
      %p66 = por %p64, %p65
      %p67 = scmp.ne.s32.totalorder %s56, %s59
      %p68 = scmp.eq.s32.totalorder %s30, 1
      %p69 = por %p67, %p68
      %p70 = scmp.ne.s32.totalorder %s59, %s60
      %p71 = scmp.eq.s32.totalorder %s30, 0
      %p72 = por %p70, %p71
      %p73 = scmp.ne.s32.totalorder %s59, %s60
      %p74 = scmp.eq.s32.totalorder %s31, 1
      %p75 = por %p73, %p74
      %p77 = scmp.ne.s32.totalorder %s60, %s76
      %p78 = scmp.eq.s32.totalorder %s31, 0
      %p79 = por %p77, %p78
      %s80 = ssub.s32 %s32, %s51
      %s81 = ssub.s32 %s34, %s43
      %s82 = sor.u32 %s80, %s81
      %p83 = scmp.eq.s32.totalorder %s82, 0
      %s85 = sadd.s32 %s84, 1
      %s86 = scalar_select %p83, %s84, %s85
      %p89 = pneg %p83
      %p90 = scmp.eq.s32.totalorder %s25, 1
      %p91 = por %p89, %p90
      %p92 = scmp.ne.s32.totalorder %s84, %s87
      %p93 = scmp.eq.s32.totalorder %s25, 0
      %p94 = por %p92, %p93
      %p95 = scmp.ne.s32.totalorder %s84, %s87
      %p96 = scmp.eq.s32.totalorder %s30, 1
      %p97 = por %p95, %p96
      %p98 = scmp.ne.s32.totalorder %s87, %s88
      %p99 = scmp.eq.s32.totalorder %s30, 0
      %p100 = por %p98, %p99
      %p101 = scmp.ne.s32.totalorder %s87, %s88
      %p102 = scmp.eq.s32.totalorder %s31, 1
      %p103 = por %p101, %p102
      %p105 = scmp.ne.s32.totalorder %s88, %s104
      %p106 = scmp.eq.s32.totalorder %s31, 0
      %p107 = por %p105, %p106
      %s108 = ssub.s32 %s32, %s51
      %s109 = ssub.s32 %s34, %s43
      %s110 = sor.u32 %s108, %s109
      %p111 = scmp.eq.s32.totalorder %s110, 0
      %s113 = sadd.s32 %s112, 1
      %s114 = scalar_select %p111, %s112, %s113
      %p117 = pneg %p111
      %p118 = scmp.eq.s32.totalorder %s25, 1
      %p119 = por %p117, %p118
      %p120 = scmp.ne.s32.totalorder %s112, %s115
      %p121 = scmp.eq.s32.totalorder %s25, 0
      %p122 = por %p120, %p121
      %p123 = scmp.ne.s32.totalorder %s112, %s115
      %p124 = scmp.eq.s32.totalorder %s30, 1
      %p125 = por %p123, %p124
      %p126 = scmp.ne.s32.totalorder %s115, %s116
      %p127 = scmp.eq.s32.totalorder %s30, 0
      %p128 = por %p126, %p127
      %p129 = scmp.ne.s32.totalorder %s115, %s116
      %p130 = scmp.eq.s32.totalorder %s31, 1
      %p131 = por %p129, %p130
      %p133 = scmp.ne.s32.totalorder %s116, %s132
      %p134 = scmp.eq.s32.totalorder %s31, 0
      %p135 = por %p133, %p134
      %s137 = sadd.s32 %s136, 1
      %p140 = scmp.eq.s32.totalorder %s25, 1
      %p141 = scmp.ne.s32.totalorder %s136, %s138
      %p142 = scmp.eq.s32.totalorder %s25, 0
      %p143 = por %p141, %p142
      %p144 = scmp.ne.s32.totalorder %s136, %s138
      %p145 = scmp.eq.s32.totalorder %s30, 1
      %p146 = por %p144, %p145
      %p147 = scmp.ne.s32.totalorder %s138, %s139
      %p148 = scmp.eq.s32.totalorder %s30, 0
      %p149 = por %p147, %p148
      %p150 = scmp.ne.s32.totalorder %s138, %s139
      %p151 = scmp.eq.s32.totalorder %s31, 1
      %p152 = por %p150, %p151
      %p154 = scmp.ne.s32.totalorder %s139, %s153
      %p155 = scmp.eq.s32.totalorder %s31, 0
      %p156 = por %p154, %p155
      %s158 = sadd.s32 %s157, 1
      %p161 = scmp.eq.s32.totalorder %s25, 1
      %p162 = scmp.ne.s32.totalorder %s157, %s159
      %p163 = scmp.eq.s32.totalorder %s25, 0
      %p164 = por %p162, %p163
      %p165 = scmp.ne.s32.totalorder %s157, %s159
      %p166 = scmp.eq.s32.totalorder %s30, 1
      %p167 = por %p165, %p166
      %p168 = scmp.ne.s32.totalorder %s159, %s160
      %p169 = scmp.eq.s32.totalorder %s30, 0
      %p170 = por %p168, %p169
      %p171 = scmp.ne.s32.totalorder %s159, %s160
      %p172 = scmp.eq.s32.totalorder %s31, 1
      %p173 = por %p171, %p172
      %p175 = scmp.ne.s32.totalorder %s160, %s174
      %p176 = scmp.eq.s32.totalorder %s31, 0
      %p177 = por %p175, %p176
      %s179 = sadd.s32 %s178, 1
      %p182 = scmp.eq.s32.totalorder %s25, 1
      %p183 = scmp.ne.s32.totalorder %s178, %s180
      %p184 = scmp.eq.s32.totalorder %s25, 0
      %p185 = por %p183, %p184
      %p186 = scmp.ne.s32.totalorder %s178, %s180
      %p187 = scmp.eq.s32.totalorder %s30, 1
      %p188 = por %p186, %p187
      %p189 = scmp.ne.s32.totalorder %s180, %s181
      %p190 = scmp.eq.s32.totalorder %s30, 0
      %p191 = por %p189, %p190
      %p192 = scmp.ne.s32.totalorder %s180, %s181
      %p193 = scmp.eq.s32.totalorder %s31, 1
      %p194 = por %p192, %p193
      %p196 = scmp.ne.s32.totalorder %s181, %s195
      %p197 = scmp.eq.s32.totalorder %s31, 0
      %p198 = por %p196, %p197
      %s200 = sadd.s32 %s199, 1
      %p203 = scmp.eq.s32.totalorder %s25, 1
      %p204 = scmp.ne.s32.totalorder %s199, %s201
      %p205 = scmp.eq.s32.totalorder %s25, 0
      %p206 = por %p204, %p205
      %p207 = scmp.ne.s32.totalorder %s199, %s201
      %p208 = scmp.eq.s32.totalorder %s30, 1
      %p209 = por %p207, %p208
      %p210 = scmp.ne.s32.totalorder %s201, %s202
      %p211 = scmp.eq.s32.totalorder %s30, 0
      %p212 = por %p210, %p211
      %p213 = scmp.ne.s32.totalorder %s201, %s202
      %p214 = scmp.eq.s32.totalorder %s31, 1
      %p215 = por %p213, %p214
      %p217 = scmp.ne.s32.totalorder %s202, %s216
      %p218 = scmp.eq.s32.totalorder %s31, 0
      %p219 = por %p217, %p218
      %s221 = sadd.s32 %s220, 1
      %p224 = scmp.eq.s32.totalorder %s25, 1
      %p225 = scmp.ne.s32.totalorder %s220, %s222
      %p226 = scmp.eq.s32.totalorder %s25, 0
      %p227 = por %p225, %p226
      %p228 = scmp.ne.s32.totalorder %s220, %s222
      %p229 = scmp.eq.s32.totalorder %s30, 1
      %p230 = por %p228, %p229
      %p231 = scmp.ne.s32.totalorder %s222, %s223
      %p232 = scmp.eq.s32.totalorder %s30, 0
      %p233 = por %p231, %p232
      %p234 = scmp.ne.s32.totalorder %s222, %s223
      %p235 = scmp.eq.s32.totalorder %s31, 1
      %p236 = por %p234, %p235
      %p238 = scmp.ne.s32.totalorder %s223, %s237
      %p239 = scmp.eq.s32.totalorder %s31, 0
      %p240 = por %p238, %p239
      %s241 = ssub.s32 %s32, %s51
      %s242 = ssub.s32 %s33, %s47
      %s243 = sor.u32 %s241, %s242
      %p244 = scmp.eq.s32.totalorder %s243, 0
      %s246 = sadd.s32 %s245, 1
      %s247 = scalar_select %p244, %s245, %s246
      %p250 = pneg %p244
      %p251 = scmp.eq.s32.totalorder %s25, 1
      %p252 = por %p250, %p251
      %p253 = scmp.ne.s32.totalorder %s245, %s248
      %p254 = scmp.eq.s32.totalorder %s25, 0
      %p255 = por %p253, %p254
      %p256 = scmp.ne.s32.totalorder %s245, %s248
      %p257 = scmp.eq.s32.totalorder %s30, 1
      %p258 = por %p256, %p257
      %p259 = scmp.ne.s32.totalorder %s248, %s249
      %p260 = scmp.eq.s32.totalorder %s30, 0
      %p261 = por %p259, %p260
      %p262 = scmp.ne.s32.totalorder %s248, %s249
      %p263 = scmp.eq.s32.totalorder %s31, 1
      %p264 = por %p262, %p263
      %p266 = scmp.ne.s32.totalorder %s249, %s265
      %p267 = scmp.eq.s32.totalorder %s31, 0
      %p268 = por %p266, %p267
      %p269 = scmp.le.s32.totalorder 1, %s25
      %p270 = scmp.lt.s32.totalorder %s25, 3
      %p271 = pnand %p269, %p270
      %p272 = pneg %p271
      // Predicated region
      $region9: #{tpu_custom_call.1} parent=5 // pred_check
        _
      $region10: #{tpu_custom_call.1} parent=5 // pred_check_branch
        %274 = sbr.rel (%p271) target = $region12
      $region11: #{tpu_custom_call.1} parent=5 // pred_region
        %s275 = ssub.s32 %s25, 1
        // Predicated region
        $region13: #{tpu_custom_call.1} parent=11 // pred_check
          %p276 = pneg %p149
        $region14: #{tpu_custom_call.1} parent=11 // pred_check_branch
          %278 = sbr.rel (%p276) target = $region16
        $region15: #{tpu_custom_call.1} parent=11 // pred_region
          %s280 = ssub.s32 256, 256
          %281 = vsyncadd [#allocation13], %s280
          %s282 = sshll.u32 [#allocation12], 4
          %s283 = int_to_ptr.vmem [resolvable:$true] %s282
          %288 = dma.hbm_to_vmem [thread:$0]  %s3, 256, %s283, [#allocation13], 64, 64, 4
        $region16: #{tpu_custom_call.1} parent=11 // pred_fallthru
          _
        // Predicated region
        $region17: #{tpu_custom_call.1} parent=11 // pred_check
          %p289 = pneg %p170
        $region18: #{tpu_custom_call.1} parent=11 // pred_check_branch
          %291 = sbr.rel (%p289) target = $region20
        $region19: #{tpu_custom_call.1} parent=11 // pred_region
          %s293 = ssub.s32 256, 256
          %294 = vsyncadd [#allocation13], %s293
          %s295 = sshll.u32 [#allocation14], 4
          %s296 = int_to_ptr.vmem [resolvable:$true] %s295
          %301 = dma.hbm_to_vmem [thread:$0]  %s4, 256, %s296, [#allocation13], 64, 64, 4
        $region20: #{tpu_custom_call.1} parent=11 // pred_fallthru
          _
        // Predicated region
        $region21: #{tpu_custom_call.1} parent=11 // pred_check
          %p302 = pneg %p191
        $region22: #{tpu_custom_call.1} parent=11 // pred_check_branch
          %304 = sbr.rel (%p302) target = $region24
        $region23: #{tpu_custom_call.1} parent=11 // pred_region
          %s306 = ssub.s32 256, 256
          %307 = vsyncadd [#allocation16], %s306
          %s308 = sshll.u32 [#allocation15], 4
          %s309 = int_to_ptr.vmem [resolvable:$true] %s308
          %314 = dma.hbm_to_vmem [thread:$0]  %s5, 256, %s309, [#allocation16], 64, 64, 4
        $region24: #{tpu_custom_call.1} parent=11 // pred_fallthru
          _
        // Predicated region
        $region25: #{tpu_custom_call.1} parent=11 // pred_check
          %p315 = pneg %p212
        $region26: #{tpu_custom_call.1} parent=11 // pred_check_branch
          %317 = sbr.rel (%p315) target = $region28
        $region27: #{tpu_custom_call.1} parent=11 // pred_region
          %s319 = ssub.s32 256, 256
          %320 = vsyncadd [#allocation16], %s319
          %s321 = sshll.u32 [#allocation17], 4
          %s322 = int_to_ptr.vmem [resolvable:$true] %s321
          %327 = dma.hbm_to_vmem [thread:$0]  %s6, 256, %s322, [#allocation16], 64, 64, 4
        $region28: #{tpu_custom_call.1} parent=11 // pred_fallthru
          _
        // Predicated region
        $region29: #{tpu_custom_call.1} parent=11 // pred_check
          %p328 = pneg %p233
        $region30: #{tpu_custom_call.1} parent=11 // pred_check_branch
          %330 = sbr.rel (%p328) target = $region32
        $region31: #{tpu_custom_call.1} parent=11 // pred_region
          _
        $region32: #{tpu_custom_call.1} parent=11 // pred_fallthru
          _
      $region12: #{tpu_custom_call.1} parent=5 // pred_fallthru
        _
      %p331 = scmp.lt.s32.totalorder %s25, 2
      // Predicated region
      $region33: #{tpu_custom_call.1} parent=5 // pred_check
        %p332 = pneg %p331
      $region34: #{tpu_custom_call.1} parent=5 // pred_check_branch
        %334 = sbr.rel (%p332) target = $region36
      $region35: #{tpu_custom_call.1} parent=5 // pred_region
        // Predicated region
        $region37: #{tpu_custom_call.1} parent=35 // pred_check
          %p335 = pneg %p66
        $region38: #{tpu_custom_call.1} parent=35 // pred_check_branch
          %337 = sbr.rel (%p335) target = $region40
        $region39: #{tpu_custom_call.1} parent=35 // pred_region
          %s338 = sand.u32 %s56, 1
          %s339 = scalar_lea.sflag [#allocation7], %s338
          %s340 = sand.u32 %s56, 1
          %s341 = smul.addr %s340, 8
          %s342 = scalar_lea.vmem [#allocation6], %s341
          %s344 = ssub.s32 128, 128
          %345 = vsyncadd %s339, %s344
          %s346 = sadd.s32 %s33, %s32
          %s347 = smul.addr %s346, 128
          %s348 = scalar_lea.hbm %s0, %s347
          %s350 = sshll.u32 %s342, 4
          %s351 = int_to_ptr.vmem [resolvable:$true] %s350
          %353 = dma.hbm_to_vmem [thread:$0]  %s348, 128, %s351, %s339
        $region40: #{tpu_custom_call.1} parent=35 // pred_fallthru
          _
        // Predicated region
        $region41: #{tpu_custom_call.1} parent=35 // pred_check
          %p354 = pneg %p94
        $region42: #{tpu_custom_call.1} parent=35 // pred_check_branch
          %356 = sbr.rel (%p354) target = $region44
        $region43: #{tpu_custom_call.1} parent=35 // pred_region
          %s357 = sand.u32 %s25, 1
          %s358 = scalar_lea.sflag [#allocation10], %s357
          %s359 = sand.u32 %s84, 1
          %s360 = smul.addr %s359, 8
          %s361 = scalar_lea.vmem [#allocation9], %s360
          %s363 = ssub.s32 128, 128
          %364 = vsyncadd %s358, %s363
          %s365 = sadd.s32 %s34, %s32
          %s366 = smul.addr %s365, 128
          %s367 = scalar_lea.hbm %s1, %s366
          %s369 = sshll.u32 %s361, 4
          %s370 = int_to_ptr.vmem [resolvable:$true] %s369
          %372 = dma.hbm_to_vmem [thread:$0]  %s367, 128, %s370, %s358
        $region44: #{tpu_custom_call.1} parent=35 // pred_fallthru
          _
        // Predicated region
        $region45: #{tpu_custom_call.1} parent=35 // pred_check
          %p373 = pneg %p122
        $region46: #{tpu_custom_call.1} parent=35 // pred_check_branch
          %375 = sbr.rel (%p373) target = $region48
        $region47: #{tpu_custom_call.1} parent=35 // pred_region
          %s376 = sand.u32 %s25, 1
          %s377 = scalar_lea.sflag [#allocation10], %s376
          %s378 = sand.u32 %s112, 1
          %s379 = smul.addr %s378, 8
          %s380 = scalar_lea.vmem [#allocation11], %s379
          %s382 = ssub.s32 128, 128
          %383 = vsyncadd %s377, %s382
          %s384 = sadd.s32 %s34, %s32
          %s385 = smul.addr %s384, 128
          %s386 = scalar_lea.hbm %s2, %s385
          %s388 = sshll.u32 %s380, 4
          %s389 = int_to_ptr.vmem [resolvable:$true] %s388
          %391 = dma.hbm_to_vmem [thread:$0]  %s386, 128, %s389, %s377
        $region48: #{tpu_custom_call.1} parent=35 // pred_fallthru
          _
      $region36: #{tpu_custom_call.1} parent=5 // pred_fallthru
        _
      %p392 = scmp.le.s32.totalorder 1, %s25
      %p393 = scmp.lt.s32.totalorder %s25, 3
      %p394 = pnand %p392, %p393
      %p395 = pneg %p394
      // Predicated region
      $region49: #{tpu_custom_call.1} parent=5 // pred_check
        _
      $region50: #{tpu_custom_call.1} parent=5 // pred_check_branch
        %397 = sbr.rel (%p394) target = $region52
      $region51: #{tpu_custom_call.1} parent=5 // pred_region
        %s398 = ssub.s32 %s25, 1
        %s399 = sand.u32 %s59, 1
        %s400 = scalar_lea.sflag [#allocation7], %s399
        %s401 = sand.u32 %s59, 1
        %s402 = smul.addr %s401, 8
        %s403 = scalar_lea.vmem [#allocation6], %s402
        // Predicated region
        $region53: #{tpu_custom_call.1} parent=51 // pred_check
          %p404 = pneg %p72
        $region54: #{tpu_custom_call.1} parent=51 // pred_check_branch
          %406 = sbr.rel (%p404) target = $region56
        $region55: #{tpu_custom_call.1} parent=51 // pred_region
          %407 = dma.done %s400, 128
        $region56: #{tpu_custom_call.1} parent=51 // pred_fallthru
          _
        %s408 = sand.u32 %s30, 1
        %s409 = scalar_lea.sflag [#allocation10], %s408
        %s410 = sand.u32 %s87, 1
        %s411 = smul.addr %s410, 8
        %s412 = scalar_lea.vmem [#allocation9], %s411
        // Predicated region
        $region57: #{tpu_custom_call.1} parent=51 // pred_check
          %p413 = pneg %p100
        $region58: #{tpu_custom_call.1} parent=51 // pred_check_branch
          %415 = sbr.rel (%p413) target = $region60
        $region59: #{tpu_custom_call.1} parent=51 // pred_region
          %416 = dma.done %s409, 128
        $region60: #{tpu_custom_call.1} parent=51 // pred_fallthru
          _
        %s417 = sand.u32 %s30, 1
        %s418 = scalar_lea.sflag [#allocation10], %s417
        %s419 = sand.u32 %s115, 1
        %s420 = smul.addr %s419, 8
        %s421 = scalar_lea.vmem [#allocation11], %s420
        // Predicated region
        $region61: #{tpu_custom_call.1} parent=51 // pred_check
          %p422 = pneg %p128
        $region62: #{tpu_custom_call.1} parent=51 // pred_check_branch
          %424 = sbr.rel (%p422) target = $region64
        $region63: #{tpu_custom_call.1} parent=51 // pred_region
          %425 = dma.done %s418, 128
        $region64: #{tpu_custom_call.1} parent=51 // pred_fallthru
          _
        // Predicated region
        $region65: #{tpu_custom_call.1} parent=51 // pred_check
          %p426 = pneg %p149
        $region66: #{tpu_custom_call.1} parent=51 // pred_check_branch
          %428 = sbr.rel (%p426) target = $region68
        $region67: #{tpu_custom_call.1} parent=51 // pred_region
          %429 = dma.done [#allocation13], 256
        $region68: #{tpu_custom_call.1} parent=51 // pred_fallthru
          _
        // Predicated region
        $region69: #{tpu_custom_call.1} parent=51 // pred_check
          %p430 = pneg %p170
        $region70: #{tpu_custom_call.1} parent=51 // pred_check_branch
          %432 = sbr.rel (%p430) target = $region72
        $region71: #{tpu_custom_call.1} parent=51 // pred_region
          %433 = dma.done [#allocation13], 256
        $region72: #{tpu_custom_call.1} parent=51 // pred_fallthru
          _
        // Predicated region
        $region73: #{tpu_custom_call.1} parent=51 // pred_check
          %p434 = pneg %p191
        $region74: #{tpu_custom_call.1} parent=51 // pred_check_branch
          %436 = sbr.rel (%p434) target = $region76
        $region75: #{tpu_custom_call.1} parent=51 // pred_region
          %437 = dma.done [#allocation16], 256
        $region76: #{tpu_custom_call.1} parent=51 // pred_fallthru
          _
        // Predicated region
        $region77: #{tpu_custom_call.1} parent=51 // pred_check
          %p438 = pneg %p212
        $region78: #{tpu_custom_call.1} parent=51 // pred_check_branch
          %440 = sbr.rel (%p438) target = $region80
        $region79: #{tpu_custom_call.1} parent=51 // pred_region
          %441 = dma.done [#allocation16], 256
        $region80: #{tpu_custom_call.1} parent=51 // pred_fallthru
          _
        %s442 = sand.u32 %s59, 1
        %s443 = scalar_lea.sflag [#allocation7], %s442
        %s444 = sand.u32 %s59, 1
        %s445 = smul.addr %s444, 8
        %s446 = scalar_lea.vmem [#allocation6], %s445
        %p447 = pneg %p72
        %p448 = pneg %p69
        %s449 = sand.u32 %s30, 1
        %s450 = scalar_lea.sflag [#allocation10], %s449
        %s451 = sand.u32 %s87, 1
        %s452 = smul.addr %s451, 8
        %s453 = scalar_lea.vmem [#allocation9], %s452
        %p454 = pneg %p100
        %p455 = pneg %p97
        %s456 = sand.u32 %s30, 1
        %s457 = scalar_lea.sflag [#allocation10], %s456
        %s458 = sand.u32 %s115, 1
        %s459 = smul.addr %s458, 8
        %s460 = scalar_lea.vmem [#allocation11], %s459
        %p461 = pneg %p128
        %p462 = pneg %p125
        %p463 = pneg %p149
        %p464 = pneg %p146
        %p465 = pneg %p170
        %p466 = pneg %p167
        %p467 = pneg %p191
        %p468 = pneg %p188
        %p469 = pneg %p212
        %p470 = pneg %p209
        %p471 = pneg %p233
        %p472 = pneg %p230
        %p473 = pneg %p261
        %p474 = pneg %p258
        %s475 = sand.u32 %s248, 1
        %s476 = scalar_lea.sflag [#allocation8], %s475
        %s477 = sand.u32 %s248, 1
        %s478 = smul.addr %s477, 8
        %s479 = scalar_lea.vmem [#allocation18], %s478
        %p481 = scmp.eq.s32.totalorder %s37, 0
        // Predicated region
        $region81: #{tpu_custom_call.1} parent=51 // pred_check
          %p482 = pneg %p481
        $region82: #{tpu_custom_call.1} parent=51 // pred_check_branch
          %484 = sbr.rel (%p482) target = $region84
        $region83: #{tpu_custom_call.1} parent=51 // pred_region
          %v485 = vld [vmem:[%s403] sm:$0xff]
          %v486 = vld [vmem:[#allocation12] sm:$0xf]
          %v487 = vld [vmem:[#allocation12 + $0x4] sm:$0xf]
          %v488 = vld [vmem:[#allocation12 + $0x8] sm:$0xf]
          %v489 = vld [vmem:[#allocation12 + $0xc] sm:$0xf]
          %v490 = vpack.c.bf16 %v485, %v485
          %v495 = vunpack.c.l.b16 %v486
          %v496 = vunpack.c.l.b16 %v487
          %v497 = vunpack.c.l.b16 %v488
          %v498 = vunpack.c.l.b16 %v489
          %v499 = vpack.c.b16 %v496, %v495
          %v500 = vpack.c.b16 %v498, %v497
          %vm503 = vcmask 261120
          %v505 = vsel %vm503, %v490, 0
          %507 = vmatprep.subr.bf16.mxu0 0
          %508 = vmatpush1.bf16.msra.mxu0 0
          %509 = vmatprep.subr.bf16.mxu0 0
          %510 = vmatpush1.bf16.msra.mxu0 0
          %511 = vmatprep.subr.bf16.mxu0 0
          %512 = vmatpush1.bf16.msra.mxu0 0
          %513 = vmatprep.subr.bf16.mxu0 0
          %514 = vmatpush1.bf16.msra.mxu0 0
          %515 = vmatprep.subr.bf16.mxu0 0
          %516 = vmatpush1.bf16.msra.mxu0 0
          %517 = vmatprep.subr.bf16.mxu0 0
          %518 = vmatpush1.bf16.msra.mxu0 0
          %519 = vmatprep.subr.bf16.mxu0 0
          %520 = vmatpush1.bf16.msra.mxu0 %v500
          %521 = vmatprep.subr.bf16.mxu0 0
          %522 = vmatpush1.bf16.msra.mxu0 %v499
          %523 = vmatprep.subr.bf16.mxu0 0
          %524 = vmatpush2.bf16.msra.mxu0 0
          %525 = vmatprep.subr.bf16.mxu0 0
          %526 = vmatpush2.bf16.msra.mxu0 0
          %527 = vmatprep.subr.bf16.mxu0 0
          %528 = vmatpush2.bf16.msra.mxu0 0
          %529 = vmatprep.subr.bf16.mxu0 0
          %530 = vmatpush2.bf16.msra.mxu0 0
          %531 = vmatprep.subr.bf16.mxu0 0
          %532 = vmatpush2.bf16.msra.mxu0 0
          %533 = vmatprep.subr.bf16.mxu0 0
          %534 = vmatpush2.bf16.msra.mxu0 0
          %535 = vmatprep.subr.bf16.mxu0 0
          %536 = vmatpush2.bf16.msra.mxu0 0
          %537 = vmatprep.subr.bf16.mxu0 0
          %538 = vmatpush2.bf16.msra.mxu0 0
          %539 = vmatprep.mubr.bf16.mxu0 0
          %540 = vmatmul.mubr.bf16.gmra.mxu0 %v505
          %v541 = vpop.f32.mrf.mxu0
          %v542 = vadd.f32 0.0, %v541
          %v543 = vpop.f32.mrf.mxu0
          %v544 = vpop.f32.mrf.mxu0
          %v545 = vpop.f32.mrf.mxu0
          %546 = vdwg.mxu0
          %v547 = vpack.c.bf16 %v542, %v542
          %vm548 = vcmask 125952
          %549 = vst.msk [vmem:[#allocation2] sm:$0xf] %vm548, %v547
          %v551 = vunpack.c.l.b16 %v547
          %v552 = vpack.c.b16 %v551, %v551
          %553 = vrot.lane.b32.xlu0 %v552, 112
          %v554 = vpop.permute.xlu0 %553
          %s556 = scalar_lea.vmem [#allocation2], 4
          %557 = vst.msk [vmem:[%s556] sm:$0xf] %vm548, %v554
          %vm558 = vcmask 7168
          %559 = vst.msk [vmem:[#allocation3] sm:$0xff] %vm558, -inf
          %560 = vst.msk [vmem:[#allocation3 + $0x8] sm:$0xff] %vm558, -inf
          %561 = vst.msk [vmem:[#allocation4] sm:$0xff] %vm558, 0.0
          %562 = vst.msk [vmem:[#allocation4 + $0x8] sm:$0xff] %vm558, 0.0
          %vm563 = vcmask 130048
          %564 = vst.msk [vmem:[#allocation5] sm:$0xff] %vm563, 0.0
          %565 = vst.msk [vmem:[#allocation5 + $0x8] sm:$0xff] %vm563, 0.0
        $region84: #{tpu_custom_call.1} parent=51 // pred_fallthru
          _
        %v566 = vld [vmem:[%s412] sm:$0xff]
        %v567 = vld [vmem:[#allocation14] sm:$0xf]
        %v568 = vld [vmem:[#allocation14 + $0x4] sm:$0xf]
        %v569 = vld [vmem:[#allocation14 + $0x8] sm:$0xf]
        %v570 = vld [vmem:[#allocation14 + $0xc] sm:$0xf]
        %v571 = vpack.c.bf16 %v566, %v566
        %v576 = vunpack.c.l.b16 %v567
        %v577 = vunpack.c.l.b16 %v568
        %v578 = vunpack.c.l.b16 %v569
        %v579 = vunpack.c.l.b16 %v570
        %v580 = vpack.c.b16 %v577, %v576
        %v581 = vpack.c.b16 %v579, %v578
        %vm584 = vcmask 261120
        %v586 = vsel %vm584, %v571, 0
        %588 = vmatprep.subr.bf16.mxu0 0
        %589 = vmatpush1.bf16.msra.mxu0 0
        %590 = vmatprep.subr.bf16.mxu0 0
        %591 = vmatpush1.bf16.msra.mxu0 0
        %592 = vmatprep.subr.bf16.mxu0 0
        %593 = vmatpush1.bf16.msra.mxu0 0
        %594 = vmatprep.subr.bf16.mxu0 0
        %595 = vmatpush1.bf16.msra.mxu0 0
        %596 = vmatprep.subr.bf16.mxu0 0
        %597 = vmatpush1.bf16.msra.mxu0 0
        %598 = vmatprep.subr.bf16.mxu0 0
        %599 = vmatpush1.bf16.msra.mxu0 0
        %600 = vmatprep.subr.bf16.mxu0 0
        %601 = vmatpush1.bf16.msra.mxu0 %v581
        %602 = vmatprep.subr.bf16.mxu0 0
        %603 = vmatpush1.bf16.msra.mxu0 %v580
        %604 = vmatprep.subr.bf16.mxu0 0
        %605 = vmatpush2.bf16.msra.mxu0 0
        %606 = vmatprep.subr.bf16.mxu0 0
        %607 = vmatpush2.bf16.msra.mxu0 0
        %608 = vmatprep.subr.bf16.mxu0 0
        %609 = vmatpush2.bf16.msra.mxu0 0
        %610 = vmatprep.subr.bf16.mxu0 0
        %611 = vmatpush2.bf16.msra.mxu0 0
        %612 = vmatprep.subr.bf16.mxu0 0
        %613 = vmatpush2.bf16.msra.mxu0 0
        %614 = vmatprep.subr.bf16.mxu0 0
        %615 = vmatpush2.bf16.msra.mxu0 0
        %616 = vmatprep.subr.bf16.mxu0 0
        %617 = vmatpush2.bf16.msra.mxu0 0
        %618 = vmatprep.subr.bf16.mxu0 0
        %619 = vmatpush2.bf16.msra.mxu0 0
        %620 = vmatprep.mubr.bf16.mxu0 0
        %621 = vmatmul.mubr.bf16.gmra.mxu0 %v586
        %v622 = vpop.f32.mrf.mxu0
        %v623 = vadd.f32 0.0, %v622
        %v624 = vpop.f32.mrf.mxu0
        %v625 = vpop.f32.mrf.mxu0
        %v626 = vpop.f32.mrf.mxu0
        %627 = vdwg.mxu0
        %v628 = vpack.c.bf16 %v623, %v623
        %v629 = vld [vmem:[%s421] sm:$0xff]
        %v630 = vld [vmem:[#allocation15] sm:$0xf]
        %v631 = vld [vmem:[#allocation15 + $0x4] sm:$0xf]
        %v632 = vld [vmem:[#allocation15 + $0x8] sm:$0xf]
        %v633 = vld [vmem:[#allocation15 + $0xc] sm:$0xf]
        %v634 = vpack.c.bf16 %v629, %v629
        %v639 = vunpack.c.l.b16 %v630
        %v640 = vunpack.c.l.b16 %v631
        %v641 = vunpack.c.l.b16 %v632
        %v642 = vunpack.c.l.b16 %v633
        %v643 = vpack.c.b16 %v640, %v639
        %v644 = vpack.c.b16 %v642, %v641
        %v648 = vsel %vm584, %v634, 0
        %650 = vmatprep.subr.bf16.mxu0 0
        %651 = vmatpush1.bf16.msra.mxu0 0
        %652 = vmatprep.subr.bf16.mxu0 0
        %653 = vmatpush1.bf16.msra.mxu0 0
        %654 = vmatprep.subr.bf16.mxu0 0
        %655 = vmatpush1.bf16.msra.mxu0 0
        %656 = vmatprep.subr.bf16.mxu0 0
        %657 = vmatpush1.bf16.msra.mxu0 0
        %658 = vmatprep.subr.bf16.mxu0 0
        %659 = vmatpush1.bf16.msra.mxu0 0
        %660 = vmatprep.subr.bf16.mxu0 0
        %661 = vmatpush1.bf16.msra.mxu0 0
        %662 = vmatprep.subr.bf16.mxu0 0
        %663 = vmatpush1.bf16.msra.mxu0 %v644
        %664 = vmatprep.subr.bf16.mxu0 0
        %665 = vmatpush1.bf16.msra.mxu0 %v643
        %666 = vmatprep.subr.bf16.mxu0 0
        %667 = vmatpush2.bf16.msra.mxu0 0
        %668 = vmatprep.subr.bf16.mxu0 0
        %669 = vmatpush2.bf16.msra.mxu0 0
        %670 = vmatprep.subr.bf16.mxu0 0
        %671 = vmatpush2.bf16.msra.mxu0 0
        %672 = vmatprep.subr.bf16.mxu0 0
        %673 = vmatpush2.bf16.msra.mxu0 0
        %674 = vmatprep.subr.bf16.mxu0 0
        %675 = vmatpush2.bf16.msra.mxu0 0
        %676 = vmatprep.subr.bf16.mxu0 0
        %677 = vmatpush2.bf16.msra.mxu0 0
        %678 = vmatprep.subr.bf16.mxu0 0
        %679 = vmatpush2.bf16.msra.mxu0 0
        %680 = vmatprep.subr.bf16.mxu0 0
        %681 = vmatpush2.bf16.msra.mxu0 0
        %682 = vmatprep.mubr.bf16.mxu0 0
        %683 = vmatmul.mubr.bf16.gmra.mxu0 %v648
        %v684 = vpop.f32.mrf.mxu0
        %v685 = vadd.f32 0.0, %v684
        %v686 = vpop.f32.mrf.mxu0
        %v687 = vpop.f32.mrf.mxu0
        %v688 = vpop.f32.mrf.mxu0
        %689 = vdwg.mxu0
        %v690 = vpack.c.bf16 %v685, %v685
        %v691 = vld [vmem:[#allocation2] sm:$0xf]
        %vm692 = vcmask 130048
        %v694 = vsel %vm692, %v691, 0
        %v697 = vsel %vm692, %v628, 0
        %699 = vmatprep.subr.bf16.mxu0 0
        %700 = vmatpush1.bf16.xpose.msra.mxu0 0
        %701 = vmatprep.subr.bf16.mxu0 0
        %702 = vmatpush1.bf16.xpose.msra.mxu0 0
        %703 = vmatprep.subr.bf16.mxu0 0
        %704 = vmatpush1.bf16.xpose.msra.mxu0 0
        %705 = vmatprep.subr.bf16.mxu0 0
        %706 = vmatpush1.bf16.xpose.msra.mxu0 0
        %707 = vmatprep.subr.bf16.mxu0 0
        %708 = vmatpush1.bf16.xpose.msra.mxu0 0
        %709 = vmatprep.subr.bf16.mxu0 0
        %710 = vmatpush1.bf16.xpose.msra.mxu0 0
        %711 = vmatprep.subr.bf16.mxu0 0
        %712 = vmatpush1.bf16.xpose.msra.mxu0 0
        %713 = vmatprep.subr.bf16.mxu0 0
        %714 = vmatpush1.bf16.xpose.msra.mxu0 %v697
        %715 = vmatprep.subr.bf16.mxu0 0
        %716 = vmatpush2.bf16.xpose.msra.mxu0 0
        %717 = vmatprep.subr.bf16.mxu0 0
        %718 = vmatpush2.bf16.xpose.msra.mxu0 0
        %719 = vmatprep.subr.bf16.mxu0 0
        %720 = vmatpush2.bf16.xpose.msra.mxu0 0
        %721 = vmatprep.subr.bf16.mxu0 0
        %722 = vmatpush2.bf16.xpose.msra.mxu0 0
        %723 = vmatprep.subr.bf16.mxu0 0
        %724 = vmatpush2.bf16.xpose.msra.mxu0 0
        %725 = vmatprep.subr.bf16.mxu0 0
        %726 = vmatpush2.bf16.xpose.msra.mxu0 0
        %727 = vmatprep.subr.bf16.mxu0 0
        %728 = vmatpush2.bf16.xpose.msra.mxu0 0
        %729 = vmatprep.subr.bf16.mxu0 0
        %730 = vmatpush2.bf16.xpose.msra.mxu0 0
        %731 = vmatprep.mubr.bf16.mxu0 0
        %732 = vmatmul.mubr.bf16.gmra.mxu0 %v694
        %v733 = vpop.f32.mrf.mxu0
        %v734 = vadd.f32 0.0, %v733
        %v735 = vpop.f32.mrf.mxu0
        %v736 = vpop.f32.mrf.mxu0
        %v737 = vpop.f32.mrf.mxu0
        %738 = vdwg.mxu0
        %v739 = vmul.f32 %v734, 0.17677669
        %v740 = vld [vmem:[#allocation3] sm:$0xff]
        %vm741 = vcmask 64512
        %v742 = vsel %vm741, %v739, -inf
        %743 = vmax.xlane.f32.xlu0 %v742
        %v744 = vpop.xlane.xlu0 %743
        %v745 = vmax.f32 %v740, %v744
        %v746 = vsub.f32 %v740, %v745
        %v747 = vmul.f32 %v746, 1.442695
        %v748 = vpow.pop %v747
        %750 = vset.pattern.permute.xlu0 0
        %751 = vperm.xlu0 %750, %v745
        %v752 = vpop.permute.xlu0 %751
        %v754 = vsub.f32 %v739, %v752
        %v755 = vmul.f32 %v754, 1.442695
        %v756 = vpow.pop %v755
        %v757 = vld [vmem:[#allocation4] sm:$0xff]
        %v758 = vmul.f32 %v748, %v757
        %v759 = vsel %vm741, %v756, 0.0
        %760 = vadd.xlane.f32.xlu0 %v759
        %v761 = vpop.xlane.xlu0 %760
        %v762 = vadd.f32 %v758, %v761
        %vm763 = vcmask 7168
        %764 = vst.msk [vmem:[#allocation4] sm:$0xff] %vm763, %v762
        %v765 = vld [vmem:[#allocation5] sm:$0xff]
        %767 = vset.pattern.permute.xlu0 0
        %768 = vperm.xlu0 %767, %v748
        %v769 = vpop.permute.xlu0 %768
        %v771 = vmul.f32 %v769, %v765
        %v772 = vpack.c.bf16 %v756, %v756
        %v774 = vsel %vm741, %v772, 0
        %vm776 = vcmask 1043456
        %v778 = vsel %vm776, %v690, 0
        %780 = vmatprep.subr.bf16.mxu0 0
        %781 = vmatpush1.bf16.msra.mxu0 0
        %782 = vmatprep.subr.bf16.mxu0 0
        %783 = vmatpush1.bf16.msra.mxu0 0
        %784 = vmatprep.subr.bf16.mxu0 0
        %785 = vmatpush1.bf16.msra.mxu0 0
        %786 = vmatprep.subr.bf16.mxu0 0
        %787 = vmatpush1.bf16.msra.mxu0 0
        %788 = vmatprep.subr.bf16.mxu0 0
        %789 = vmatpush1.bf16.msra.mxu0 0
        %790 = vmatprep.subr.bf16.mxu0 0
        %791 = vmatpush1.bf16.msra.mxu0 0
        %792 = vmatprep.subr.bf16.mxu0 0
        %793 = vmatpush1.bf16.msra.mxu0 0
        %794 = vmatprep.subr.bf16.mxu0 0
        %795 = vmatpush1.bf16.msra.mxu0 %v778
        %796 = vmatprep.subr.bf16.mxu0 0
        %797 = vmatpush2.bf16.msra.mxu0 0
        %798 = vmatprep.subr.bf16.mxu0 0
        %799 = vmatpush2.bf16.msra.mxu0 0
        %800 = vmatprep.subr.bf16.mxu0 0
        %801 = vmatpush2.bf16.msra.mxu0 0
        %802 = vmatprep.subr.bf16.mxu0 0
        %803 = vmatpush2.bf16.msra.mxu0 0
        %804 = vmatprep.subr.bf16.mxu0 0
        %805 = vmatpush2.bf16.msra.mxu0 0
        %806 = vmatprep.subr.bf16.mxu0 0
        %807 = vmatpush2.bf16.msra.mxu0 0
        %808 = vmatprep.subr.bf16.mxu0 0
        %809 = vmatpush2.bf16.msra.mxu0 0
        %810 = vmatprep.subr.bf16.mxu0 0
        %811 = vmatpush2.bf16.msra.mxu0 0
        %812 = vmatprep.mubr.bf16.mxu0 0
        %813 = vmatmul.mubr.bf16.gmra.mxu0 %v774
        %v814 = vpop.f32.mrf.mxu0
        %v815 = vadd.f32 0.0, %v814
        %v816 = vpop.f32.mrf.mxu0
        %v817 = vpop.f32.mrf.mxu0
        %v818 = vpop.f32.mrf.mxu0
        %819 = vdwg.mxu0
        %v820 = vadd.f32 %v771, %v815
        %821 = vst.msk [vmem:[#allocation5] sm:$0xff] %vm692, %v820
        %822 = vst.msk [vmem:[#allocation3] sm:$0xff] %vm763, %v745
        %s823 = scalar_lea.vmem [#allocation2], 4
        %v824 = vld [vmem:[%s823] sm:$0xf]
        %826 = vrot.lane.b32.xlu0 %v628, 112
        %v827 = vpop.permute.xlu0 %826
        %v829 = vsel %vm692, %v824, 0
        %v832 = vsel %vm692, %v827, 0
        %834 = vmatprep.subr.bf16.mxu0 0
        %835 = vmatpush1.bf16.xpose.msra.mxu0 0
        %836 = vmatprep.subr.bf16.mxu0 0
        %837 = vmatpush1.bf16.xpose.msra.mxu0 0
        %838 = vmatprep.subr.bf16.mxu0 0
        %839 = vmatpush1.bf16.xpose.msra.mxu0 0
        %840 = vmatprep.subr.bf16.mxu0 0
        %841 = vmatpush1.bf16.xpose.msra.mxu0 0
        %842 = vmatprep.subr.bf16.mxu0 0
        %843 = vmatpush1.bf16.xpose.msra.mxu0 0
        %844 = vmatprep.subr.bf16.mxu0 0
        %845 = vmatpush1.bf16.xpose.msra.mxu0 0
        %846 = vmatprep.subr.bf16.mxu0 0
        %847 = vmatpush1.bf16.xpose.msra.mxu0 0
        %848 = vmatprep.subr.bf16.mxu0 0
        %849 = vmatpush1.bf16.xpose.msra.mxu0 %v832
        %850 = vmatprep.subr.bf16.mxu0 0
        %851 = vmatpush2.bf16.xpose.msra.mxu0 0
        %852 = vmatprep.subr.bf16.mxu0 0
        %853 = vmatpush2.bf16.xpose.msra.mxu0 0
        %854 = vmatprep.subr.bf16.mxu0 0
        %855 = vmatpush2.bf16.xpose.msra.mxu0 0
        %856 = vmatprep.subr.bf16.mxu0 0
        %857 = vmatpush2.bf16.xpose.msra.mxu0 0
        %858 = vmatprep.subr.bf16.mxu0 0
        %859 = vmatpush2.bf16.xpose.msra.mxu0 0
        %860 = vmatprep.subr.bf16.mxu0 0
        %861 = vmatpush2.bf16.xpose.msra.mxu0 0
        %862 = vmatprep.subr.bf16.mxu0 0
        %863 = vmatpush2.bf16.xpose.msra.mxu0 0
        %864 = vmatprep.subr.bf16.mxu0 0
        %865 = vmatpush2.bf16.xpose.msra.mxu0 0
        %866 = vmatprep.mubr.bf16.mxu0 0
        %867 = vmatmul.mubr.bf16.gmra.mxu0 %v829
        %v868 = vpop.f32.mrf.mxu0
        %v869 = vadd.f32 0.0, %v868
        %v870 = vpop.f32.mrf.mxu0
        %v871 = vpop.f32.mrf.mxu0
        %v872 = vpop.f32.mrf.mxu0
        %873 = vdwg.mxu0
        %v874 = vmul.f32 %v869, 0.17677669
        %s875 = scalar_lea.vmem [#allocation3], 8
        %v876 = vld [vmem:[%s875] sm:$0xff]
        %v877 = vsel %vm741, %v874, -inf
        %878 = vmax.xlane.f32.xlu0 %v877
        %v879 = vpop.xlane.xlu0 %878
        %v880 = vmax.f32 %v876, %v879
        %v881 = vsub.f32 %v876, %v880
        %v882 = vmul.f32 %v881, 1.442695
        %v883 = vpow.pop %v882
        %885 = vset.pattern.permute.xlu0 0
        %886 = vperm.xlu0 %885, %v880
        %v887 = vpop.permute.xlu0 %886
        %v889 = vsub.f32 %v874, %v887
        %v890 = vmul.f32 %v889, 1.442695
        %v891 = vpow.pop %v890
        %s892 = scalar_lea.vmem [#allocation4], 8
        %v893 = vld [vmem:[%s892] sm:$0xff]
        %v894 = vmul.f32 %v883, %v893
        %v895 = vsel %vm741, %v891, 0.0
        %896 = vadd.xlane.f32.xlu0 %v895
        %v897 = vpop.xlane.xlu0 %896
        %v898 = vadd.f32 %v894, %v897
        %899 = vst.msk [vmem:[%s892] sm:$0xff] %vm763, %v898
        %s900 = scalar_lea.vmem [#allocation5], 8
        %v901 = vld [vmem:[%s900] sm:$0xff]
        %903 = vset.pattern.permute.xlu0 0
        %904 = vperm.xlu0 %903, %v883
        %v905 = vpop.permute.xlu0 %904
        %v907 = vmul.f32 %v905, %v901
        %v908 = vpack.c.bf16 %v891, %v891
        %910 = vrot.lane.b32.xlu0 %v690, 112
        %v911 = vpop.permute.xlu0 %910
        %v913 = vsel %vm741, %v908, 0
        %v916 = vsel %vm776, %v911, 0
        %918 = vmatprep.subr.bf16.mxu0 0
        %919 = vmatpush1.bf16.msra.mxu0 0
        %920 = vmatprep.subr.bf16.mxu0 0
        %921 = vmatpush1.bf16.msra.mxu0 0
        %922 = vmatprep.subr.bf16.mxu0 0
        %923 = vmatpush1.bf16.msra.mxu0 0
        %924 = vmatprep.subr.bf16.mxu0 0
        %925 = vmatpush1.bf16.msra.mxu0 0
        %926 = vmatprep.subr.bf16.mxu0 0
        %927 = vmatpush1.bf16.msra.mxu0 0
        %928 = vmatprep.subr.bf16.mxu0 0
        %929 = vmatpush1.bf16.msra.mxu0 0
        %930 = vmatprep.subr.bf16.mxu0 0
        %931 = vmatpush1.bf16.msra.mxu0 0
        %932 = vmatprep.subr.bf16.mxu0 0
        %933 = vmatpush1.bf16.msra.mxu0 %v916
        %934 = vmatprep.subr.bf16.mxu0 0
        %935 = vmatpush2.bf16.msra.mxu0 0
        %936 = vmatprep.subr.bf16.mxu0 0
        %937 = vmatpush2.bf16.msra.mxu0 0
        %938 = vmatprep.subr.bf16.mxu0 0
        %939 = vmatpush2.bf16.msra.mxu0 0
        %940 = vmatprep.subr.bf16.mxu0 0
        %941 = vmatpush2.bf16.msra.mxu0 0
        %942 = vmatprep.subr.bf16.mxu0 0
        %943 = vmatpush2.bf16.msra.mxu0 0
        %944 = vmatprep.subr.bf16.mxu0 0
        %945 = vmatpush2.bf16.msra.mxu0 0
        %946 = vmatprep.subr.bf16.mxu0 0
        %947 = vmatpush2.bf16.msra.mxu0 0
        %948 = vmatprep.subr.bf16.mxu0 0
        %949 = vmatpush2.bf16.msra.mxu0 0
        %950 = vmatprep.mubr.bf16.mxu0 0
        %951 = vmatmul.mubr.bf16.gmra.mxu0 %v913
        %v952 = vpop.f32.mrf.mxu0
        %v953 = vadd.f32 0.0, %v952
        %v954 = vpop.f32.mrf.mxu0
        %v955 = vpop.f32.mrf.mxu0
        %v956 = vpop.f32.mrf.mxu0
        %957 = vdwg.mxu0
        %v958 = vadd.f32 %v907, %v953
        %959 = vst.msk [vmem:[%s900] sm:$0xff] %vm692, %v958
        %960 = vst.msk [vmem:[%s875] sm:$0xff] %vm763, %v880
        // Predicated region
        $region85: #{tpu_custom_call.1} parent=51 // pred_check
          %p961 = pneg %p481
        $region86: #{tpu_custom_call.1} parent=51 // pred_check_branch
          %963 = sbr.rel (%p961) target = $region88
        $region87: #{tpu_custom_call.1} parent=51 // pred_region
          %v964 = vld [vmem:[#allocation5] sm:$0xff]
          %v965 = vld [vmem:[#allocation4] sm:$0xff]
          %967 = vset.pattern.permute.xlu0 0
          %968 = vperm.xlu0 %967, %v965
          %v969 = vpop.permute.xlu0 %968
          %v971 = vrcp.pop %v969
          %v972 = vmul.f32 %v964, %v971
          %v973 = vpack.c.bf16 %v972, %v972
          %v974 = vld [vmem:[%s900] sm:$0xff]
          %v975 = vld [vmem:[%s892] sm:$0xff]
          %977 = vset.pattern.permute.xlu0 0
          %978 = vperm.xlu0 %977, %v975
          %v979 = vpop.permute.xlu0 %978
          %v981 = vrcp.pop %v979
          %v982 = vmul.f32 %v974, %v981
          %v983 = vpack.c.bf16 %v982, %v982
          %985 = vrot.lane.b32.xlu0 %v983, 16
          %v986 = vpop.permute.xlu0 %985
          %v989 = vsel %vm692, %v973, %v986
          %v990 = vld [vmem:[#allocation17] sm:$0xf]
          %v991 = vld [vmem:[#allocation17 + $0x4] sm:$0xf]
          %v992 = vld [vmem:[#allocation17 + $0x8] sm:$0xf]
          %v993 = vld [vmem:[#allocation17 + $0xc] sm:$0xf]
          %v994 = vld [vmem:[%s7] sm:$0x1]
          %v996 = vlaneseq
          %v997 = vshrl.u32 %v996, 7
          %v998 = vsub.s32 0, %v997
          %v999 = vrot.slane %v994, %v998
          %v1005 = vunpack.c.l.b16 %v990
          %v1006 = vunpack.c.l.b16 %v991
          %v1007 = vunpack.c.l.b16 %v992
          %v1008 = vunpack.c.l.b16 %v993
          %v1009 = vpack.c.b16 %v1006, %v1005
          %v1010 = vpack.c.b16 %v1008, %v1007
          %v1013 = vsel %vm584, %v989, 0
          %1015 = vmatprep.subr.bf16.mxu0 0
          %1016 = vmatpush1.bf16.msra.mxu0 0
          %1017 = vmatprep.subr.bf16.mxu0 0
          %1018 = vmatpush1.bf16.msra.mxu0 0
          %1019 = vmatprep.subr.bf16.mxu0 0
          %1020 = vmatpush1.bf16.msra.mxu0 0
          %1021 = vmatprep.subr.bf16.mxu0 0
          %1022 = vmatpush1.bf16.msra.mxu0 0
          %1023 = vmatprep.subr.bf16.mxu0 0
          %1024 = vmatpush1.bf16.msra.mxu0 0
          %1025 = vmatprep.subr.bf16.mxu0 0
          %1026 = vmatpush1.bf16.msra.mxu0 0
          %1027 = vmatprep.subr.bf16.mxu0 0
          %1028 = vmatpush1.bf16.msra.mxu0 %v1010
          %1029 = vmatprep.subr.bf16.mxu0 0
          %1030 = vmatpush1.bf16.msra.mxu0 %v1009
          %1031 = vmatprep.subr.bf16.mxu0 0
          %1032 = vmatpush2.bf16.msra.mxu0 0
          %1033 = vmatprep.subr.bf16.mxu0 0
          %1034 = vmatpush2.bf16.msra.mxu0 0
          %1035 = vmatprep.subr.bf16.mxu0 0
          %1036 = vmatpush2.bf16.msra.mxu0 0
          %1037 = vmatprep.subr.bf16.mxu0 0
          %1038 = vmatpush2.bf16.msra.mxu0 0
          %1039 = vmatprep.subr.bf16.mxu0 0
          %1040 = vmatpush2.bf16.msra.mxu0 0
          %1041 = vmatprep.subr.bf16.mxu0 0
          %1042 = vmatpush2.bf16.msra.mxu0 0
          %1043 = vmatprep.subr.bf16.mxu0 0
          %1044 = vmatpush2.bf16.msra.mxu0 0
          %1045 = vmatprep.subr.bf16.mxu0 0
          %1046 = vmatpush2.bf16.msra.mxu0 0
          %1047 = vmatprep.mubr.bf16.mxu0 0
          %1048 = vmatmul.mubr.bf16.gmra.mxu0 %v1013
          %v1049 = vpop.f32.mrf.mxu0
          %v1050 = vadd.f32 %v999, %v1049
          %v1051 = vpop.f32.mrf.mxu0
          %v1052 = vpop.f32.mrf.mxu0
          %v1053 = vpop.f32.mrf.mxu0
          %1054 = vdwg.mxu0
          %1055 = vst.msk [vmem:[%s479] sm:$0xff] %vm584, %v1050
        $region88: #{tpu_custom_call.1} parent=51 // pred_fallthru
          _
        %s1056 = sand.u32 %s248, 1
        %s1057 = scalar_lea.sflag [#allocation8], %s1056
        %s1058 = sand.u32 %s248, 1
        %s1059 = smul.addr %s1058, 8
        %s1060 = scalar_lea.vmem [#allocation18], %s1059
        // Predicated region
        $region89: #{tpu_custom_call.1} parent=51 // pred_check
          %p1061 = pneg %p258
        $region90: #{tpu_custom_call.1} parent=51 // pred_check_branch
          %1063 = sbr.rel (%p1061) target = $region92
        $region91: #{tpu_custom_call.1} parent=51 // pred_region
          %s1065 = ssub.s32 128, 128
          %1066 = vsyncadd %s1057, %s1065
          %s1067 = sadd.s32 %s36, %s35
          %s1068 = smul.addr %s1067, 128
          %s1069 = scalar_lea.hbm %s8, %s1068
          %s1071 = sshll.u32 %s1060, 4
          %s1072 = int_to_ptr.vmem [resolvable:$true] %s1071
          %1074 = dma.vmem_to_hbm [thread:$0]  %s1072, 128, %s1069, %s1057
        $region92: #{tpu_custom_call.1} parent=51 // pred_fallthru
          _
      $region52: #{tpu_custom_call.1} parent=5 // pred_fallthru
        _
      %p1075 = scmp.le.s32.totalorder 2, %s25
      // Predicated region
      $region93: #{tpu_custom_call.1} parent=5 // pred_check
        %p1076 = pneg %p1075
      $region94: #{tpu_custom_call.1} parent=5 // pred_check_branch
        %1078 = sbr.rel (%p1076) target = $region96
      $region95: #{tpu_custom_call.1} parent=5 // pred_region
        %s1079 = ssub.s32 %s25, 2
        // Predicated region
        $region97: #{tpu_custom_call.1} parent=95 // pred_check
          %p1080 = pneg %p264
        $region98: #{tpu_custom_call.1} parent=95 // pred_check_branch
          %1082 = sbr.rel (%p1080) target = $region100
        $region99: #{tpu_custom_call.1} parent=95 // pred_region
          %s1083 = sand.u32 %s249, 1
          %s1084 = scalar_lea.sflag [#allocation8], %s1083
          %s1085 = sand.u32 %s249, 1
          %s1086 = smul.addr %s1085, 8
          %s1087 = scalar_lea.vmem [#allocation18], %s1086
          %1088 = dma.done %s1084, 128
        $region100: #{tpu_custom_call.1} parent=95 // pred_fallthru
          _
      $region96: #{tpu_custom_call.1} parent=5 // pred_fallthru
        _
    $region6: #{tpu_custom_call.1} parent=1 // loop_footer
      %s29 = sadd.s32 1, %s25
    $region7: #{tpu_custom_call.1} parent=1 // loop_footer_branch
      %24 = sbr.rel target = $region3
    $region8: #{tpu_custom_call.1} parent=1 // loop_exit
      _
    %1089 = vsyncpa [#allocation7], 1
    %s1090 = scalar_lea.sflag [#allocation7], 1
    %1091 = vsyncpa %s1090, 1
    %1092 = vsyncpa [#allocation10], 1
    %s1093 = scalar_lea.sflag [#allocation10], 1
    %1094 = vsyncpa %s1093, 1
    %1095 = vsyncpa [#allocation13], 1
    %1096 = vsyncpa [#allocation16], 1
    %1097 = vsyncpa [#allocation8], 1
    %s1098 = scalar_lea.sflag [#allocation8], 1
    %1099 = vsyncpa %s1098, 1

</llo_original>
